<compile_context>
chip_gen: v7x
topology: tpu7x:2x2x1
jax: 0.10.0
libtpu: 0.0.40
codegen_flags: <defaults>
</compile_context>

<pallas_src>
import functools

import jax
import jax.numpy as jnp
from jax.experimental import pallas as pl
from jax.experimental.pallas import tpu as pltpu

KH = KW = 5
STRIDE = 2
PAD = 2
EPS = 1e-3  # BatchNorm2d(144, eps=0.001) in the reference module


def _dwconv_bn_kernel(xe_ref, xo_ref, w_ref, g_ref, b_ref, o_ref, *, eps):
    """Fused depthwise 5x5 / stride-2 conv + train-mode BatchNorm.

    xe_ref : (N, Hp, We,   Cp)  even padded-input columns  xe[..., j, :] == xp[..., 2j,   :]
    xo_ref : (N, Hp, Wodd, Cp)  odd  padded-input columns  xo[..., j, :] == xp[..., 2j+1, :]
    w_ref  : (KH*KW, Cp)        depthwise taps (tap index = kh*KW + kw)
    g_ref  : (1, Cp)            BN gamma
    b_ref  : (1, Cp)            BN beta
    o_ref  : (N, Ho, Wo, Cp)    output (written pre-BN in pass 1, normalized in pass 2)
    """
    N, Ho, Wo, Cp = o_ref.shape
    w = w_ref[...]                               # (25, Cp): ~8 vregs, resident for pass 1
    inv_cnt = 1.0 / float(N * Ho * Wo)

    def conv_row(n, i):
        # One output row: all 25 taps; accumulator is only (Wo, Cp) -> few live vregs.
        acc = jnp.zeros((Wo, Cp), jnp.float32)
        for kh in range(KH):
            ih = 2 * i + kh                                   # padded-input row (dynamic)
            for kw in range(KW):
                src = xe_ref if kw % 2 == 0 else xo_ref       # W parity of this tap
                patch = src[n, ih, pl.ds(kw // 2, Wo), :]     # (Wo, Cp) contiguous slice
                acc = acc + patch * w[kh * KW + kw:kh * KW + kw + 1, :]
        return acc

    # ---- pass 1: conv rows -> pre-BN output, fused per-channel sum / sum-of-squares ----
    carry = (jnp.zeros((1, Cp), jnp.float32), jnp.zeros((1, Cp), jnp.float32))
    for n in range(N):                                        # N is small and static
        def row_body(i, c, n=n):
            s, ss = c
            acc = conv_row(n, i)
            o_ref[n, i] = acc                                 # pre-BN row; normalized later
            s = s + jnp.sum(acc, axis=0, keepdims=True)
            ss = ss + jnp.sum(acc * acc, axis=0, keepdims=True)
            return (s, ss)
        carry = jax.lax.fori_loop(0, Ho, row_body, carry)
    sum_c, ssq_c = carry

    # ---- batch statistics + folded affine ----
    # NOTE: one-pass E[x^2] - E[x]^2 in f32; eps=1e-3 dominates any cancellation here.
    mean = sum_c * inv_cnt                                    # (1, Cp)
    var = jnp.maximum(ssq_c * inv_cnt - mean * mean, 0.0)     # (1, Cp)
    scale = g_ref[...] * jax.lax.rsqrt(var + eps)             # (1, Cp)
    shift = b_ref[...] - mean * scale                         # (1, Cp)

    # ---- pass 2: normalize the VMEM-resident output in place (2 ops/element) ----
    for n in range(N):
        def norm_body(i, _, n=n):
            o_ref[n, i] = o_ref[n, i] * scale + shift
            return 0
        jax.lax.fori_loop(0, Ho, norm_body, 0)


def depthwise_conv_bn(x_nchw, weight, gamma, beta, eps=EPS):
    """x_nchw: (N, C, H, W); weight: (C, 1, 5, 5) PyTorch depthwise layout."""
    N, C, H, W = x_nchw.shape
    Ho = (H + 2 * PAD - KH) // STRIDE + 1
    Wo = (W + 2 * PAD - KW) // STRIDE + 1
    Cp = ((C + 127) // 128) * 128            # lane-dense channel padding (144 -> 256)

    # NCHW -> NHWC, zero-pad spatially and on channels.
    x = jnp.transpose(x_nchw, (0, 2, 3, 1))
    xp = jnp.pad(x, ((0, 0), (PAD, PAD), (PAD, PAD), (0, Cp - C)))
    # Split only the W axis by parity (H parity is handled in-kernel).
    xe = xp[:, :, 0::2, :]                   # (N, Hp, ceil(Wp/2),  Cp)
    xo = xp[:, :, 1::2, :]                   # (N, Hp, floor(Wp/2), Cp)

    w = jnp.pad(jnp.transpose(weight.reshape(C, KH * KW), (1, 0)),
                ((0, 0), (0, Cp - C))).astype(jnp.float32)      # (25, Cp)
    g = jnp.pad(gamma.astype(jnp.float32), (0, Cp - C)).reshape(1, Cp)
    b = jnp.pad(beta.astype(jnp.float32), (0, Cp - C)).reshape(1, Cp)

    def full_spec(shape):
        return pl.BlockSpec(shape, lambda i: (0,) * len(shape))

    flops = int(2 * KH * KW * N * Ho * Wo * C)
    bytes_accessed = int(4 * (xe.size + xo.size + w.size + g.size + b.size
                              + N * Ho * Wo * Cp))

    out = pl.pallas_call(
        functools.partial(_dwconv_bn_kernel, eps=eps),
        grid=(1,),
        in_specs=[full_spec(xe.shape), full_spec(xo.shape),
                  full_spec(w.shape), full_spec(g.shape), full_spec(b.shape)],
        out_specs=full_spec((N, Ho, Wo, Cp)),
        out_shape=jax.ShapeDtypeStruct((N, Ho, Wo, Cp), jnp.float32),
        compiler_params=pltpu.CompilerParams(
            dimension_semantics=("arbitrary",)),
        cost_estimate=pl.CostEstimate(flops=flops, transcendentals=C,
                                      bytes_accessed=bytes_accessed),
    )(xe, xo, w, g, b)

    # TODO(synk): v7x has 2 TensorCores — split the row loop over a "parallel" grid
    # axis with a cross-core reduction of (sum, sumsq); this version is single-TC.
    # TODO(synk): running_mean / running_var are not updated (train-mode forward with
    # batch statistics only; eval-mode forward with running stats is not implemented).
    return jnp.transpose(out[..., :C], (0, 3, 1, 2))           # back to NCHW


def _reference(x_nchw, weight, gamma, beta, eps=EPS):
    """Pure-JAX reference (lax conv + batch-norm) for validation."""
    C = x_nchw.shape[1]
    y = jax.lax.conv_general_dilated(
        x_nchw, weight,
        window_strides=(STRIDE, STRIDE),
        padding=((PAD, PAD), (PAD, PAD)),
        dimension_numbers=("NCHW", "OIHW", "NCHW"),
        feature_group_count=C)
    mean = jnp.mean(y, axis=(0, 2, 3), keepdims=True)
    var = jnp.mean(jnp.square(y - mean), axis=(0, 2, 3), keepdims=True)
    return (y - mean) * jax.lax.rsqrt(var + eps) * gamma.reshape(1, C, 1, 1) \
        + beta.reshape(1, C, 1, 1)


if __name__ == "__main__":
    key = jax.random.PRNGKey(0)
    k_x, k_w, k_g, k_b = jax.random.split(key, 4)

    # Small shapes consistent with the module (C is fixed at 144 by __init__).
    N, C, H, W = 2, 144, 16, 16
    x = jax.random.normal(k_x, (N, C, H, W), dtype=jnp.float32)
    weight = jax.random.normal(k_w, (C, 1, KH, KW), dtype=jnp.float32) * 0.1
    gamma = 1.0 + 0.1 * jax.random.normal(k_g, (C,), dtype=jnp.float32)
    beta = 0.1 * jax.random.normal(k_b, (C,), dtype=jnp.float32)

    out = jax.block_until_ready(depthwise_conv_bn(x, weight, gamma, beta))
    ref = jax.block_until_ready(_reference(x, weight, gamma, beta))

    assert out.shape == ref.shape, (out.shape, ref.shape)
    assert jnp.allclose(out, ref, atol=5e-4, rtol=5e-4), \
        float(jnp.max(jnp.abs(out - ref)))

    print("KERNEL_OK")
</pallas_src>

<mosaic_0001>
module attributes {stable_mosaic.version = 11 : i64} {
  func.func @_dwconv_bn_kernel(%arg0: i32, %arg1: memref<2x20x10x256xf32, #tpu.memory_space<vmem>>, %arg2: memref<2x20x10x256xf32, #tpu.memory_space<vmem>>, %arg3: memref<25x256xf32, #tpu.memory_space<vmem>>, %arg4: memref<1x256xf32, #tpu.memory_space<vmem>>, %arg5: memref<1x256xf32, #tpu.memory_space<vmem>>, %arg6: memref<2x8x8x256xf32, #tpu.memory_space<vmem>>) attributes {dimension_semantics = [#tpu.dimension_semantics<arbitrary>], iteration_bounds = array<i64: 1>, scalar_prefetch = 0 : i64, scratch_operands = 0 : i64, tpu.core_type = #tpu.core_type<tc>, window_params = [{pipeline_mode = #tpu.pipeline_mode<synchronous>, transform_indices = @transform_0, window_bounds = array<i64: 2, 20, 10, 256>}, {pipeline_mode = #tpu.pipeline_mode<synchronous>, transform_indices = @transform_1, window_bounds = array<i64: 2, 20, 10, 256>}, {pipeline_mode = #tpu.pipeline_mode<synchronous>, transform_indices = @transform_2, window_bounds = array<i64: 25, 256>}, {pipeline_mode = #tpu.pipeline_mode<synchronous>, transform_indices = @transform_3, window_bounds = array<i64: 1, 256>}, {pipeline_mode = #tpu.pipeline_mode<synchronous>, transform_indices = @transform_4, window_bounds = array<i64: 1, 256>}, {pipeline_mode = #tpu.pipeline_mode<synchronous>, transform_indices = @transform_5, window_bounds = array<i64: 2, 8, 8, 256>}]} {
    %c0 = arith.constant 0 : index
    %c0_0 = arith.constant 0 : index
    %0 = vector.load %arg3[%c0, %c0_0] : memref<25x256xf32, #tpu.memory_space<vmem>>, vector<25x256xf32>
    %cst = arith.constant 0.000000e+00 : f32
    %1 = vector.broadcast %cst : f32 to vector<1x256xf32>
    %cst_1 = arith.constant 0.000000e+00 : f32
    %2 = vector.broadcast %cst_1 : f32 to vector<1x256xf32>
    %c0_i32 = arith.constant 0 : i32
    %c8_i32 = arith.constant 8 : i32
    %3 = arith.addi %c0_i32, %c8_i32 : i32
    %c1_i32 = arith.constant 1 : i32
    %4:2 = scf.for %arg7 = %c0_i32 to %3 step %c1_i32 iter_args(%arg8 = %1, %arg9 = %2) -> (vector<1x256xf32>, vector<1x256xf32>)  : i32 {
      %cst_23 = arith.constant 0.000000e+00 : f32
      %25 = vector.broadcast %cst_23 : f32 to vector<8x256xf32>
      %c2_i32 = arith.constant 2 : i32
      %26 = arith.muli %c2_i32, %arg7 : i32
      %c0_i32_24 = arith.constant 0 : i32
      %27 = arith.addi %26, %c0_i32_24 : i32
      %c0_25 = arith.constant 0 : index
      %28 = arith.index_cast %27 : i32 to index
      %c0_26 = arith.constant 0 : index
      %c0_27 = arith.constant 0 : index
      %29 = vector.load %arg1[%c0_25, %28, %c0_26, %c0_27] : memref<2x20x10x256xf32, #tpu.memory_space<vmem>>, vector<1x1x8x256xf32>
      %30 = vector.shape_cast %29 : vector<1x1x8x256xf32> to vector<8x256xf32>
      %31 = vector.extract_strided_slice %0 {offsets = [0, 0], sizes = [1, 256], strides = [1, 1]} : vector<25x256xf32> to vector<1x256xf32>
      %32 = vector.broadcast %31 : vector<1x256xf32> to vector<8x256xf32>
      %33 = arith.mulf %30, %32 : vector<8x256xf32>
      %34 = arith.addf %25, %33 : vector<8x256xf32>
      %c0_28 = arith.constant 0 : index
      %35 = arith.index_cast %27 : i32 to index
      %c0_29 = arith.constant 0 : index
      %c0_30 = arith.constant 0 : index
      %36 = vector.load %arg2[%c0_28, %35, %c0_29, %c0_30] : memref<2x20x10x256xf32, #tpu.memory_space<vmem>>, vector<1x1x8x256xf32>
      %37 = vector.shape_cast %36 : vector<1x1x8x256xf32> to vector<8x256xf32>
      %38 = vector.extract_strided_slice %0 {offsets = [1, 0], sizes = [1, 256], strides = [1, 1]} : vector<25x256xf32> to vector<1x256xf32>
      %39 = vector.broadcast %38 : vector<1x256xf32> to vector<8x256xf32>
      %40 = arith.mulf %37, %39 : vector<8x256xf32>
      %41 = arith.addf %34, %40 : vector<8x256xf32>
      %c0_31 = arith.constant 0 : index
      %42 = arith.index_cast %27 : i32 to index
      %c1 = arith.constant 1 : index
      %c0_32 = arith.constant 0 : index
      %43 = vector.load %arg1[%c0_31, %42, %c1, %c0_32] : memref<2x20x10x256xf32, #tpu.memory_space<vmem>>, vector<1x1x8x256xf32>
      %44 = vector.shape_cast %43 : vector<1x1x8x256xf32> to vector<8x256xf32>
      %45 = vector.extract_strided_slice %0 {offsets = [2, 0], sizes = [1, 256], strides = [1, 1]} : vector<25x256xf32> to vector<1x256xf32>
      %46 = vector.broadcast %45 : vector<1x256xf32> to vector<8x256xf32>
      %47 = arith.mulf %44, %46 : vector<8x256xf32>
      %48 = arith.addf %41, %47 : vector<8x256xf32>
      %c0_33 = arith.constant 0 : index
      %49 = arith.index_cast %27 : i32 to index
      %c1_34 = arith.constant 1 : index
      %c0_35 = arith.constant 0 : index
      %50 = vector.load %arg2[%c0_33, %49, %c1_34, %c0_35] : memref<2x20x10x256xf32, #tpu.memory_space<vmem>>, vector<1x1x8x256xf32>
      %51 = vector.shape_cast %50 : vector<1x1x8x256xf32> to vector<8x256xf32>
      %52 = vector.extract_strided_slice %0 {offsets = [3, 0], sizes = [1, 256], strides = [1, 1]} : vector<25x256xf32> to vector<1x256xf32>
      %53 = vector.broadcast %52 : vector<1x256xf32> to vector<8x256xf32>
      %54 = arith.mulf %51, %53 : vector<8x256xf32>
      %55 = arith.addf %48, %54 : vector<8x256xf32>
      %c0_36 = arith.constant 0 : index
      %56 = arith.index_cast %27 : i32 to index
      %c2 = arith.constant 2 : index
      %c0_37 = arith.constant 0 : index
      %57 = vector.load %arg1[%c0_36, %56, %c2, %c0_37] : memref<2x20x10x256xf32, #tpu.memory_space<vmem>>, vector<1x1x8x256xf32>
      %58 = vector.shape_cast %57 : vector<1x1x8x256xf32> to vector<8x256xf32>
      %59 = vector.extract_strided_slice %0 {offsets = [4, 0], sizes = [1, 256], strides = [1, 1]} : vector<25x256xf32> to vector<1x256xf32>
      %60 = vector.broadcast %59 : vector<1x256xf32> to vector<8x256xf32>
      %61 = arith.mulf %58, %60 : vector<8x256xf32>
      %62 = arith.addf %55, %61 : vector<8x256xf32>
      %c2_i32_38 = arith.constant 2 : i32
      %63 = arith.muli %c2_i32_38, %arg7 : i32
      %c1_i32_39 = arith.constant 1 : i32
      %64 = arith.addi %63, %c1_i32_39 : i32
      %c0_40 = arith.constant 0 : index
      %65 = arith.index_cast %64 : i32 to index
      %c0_41 = arith.constant 0 : index
      %c0_42 = arith.constant 0 : index
      %66 = vector.load %arg1[%c0_40, %65, %c0_41, %c0_42] : memref<2x20x10x256xf32, #tpu.memory_space<vmem>>, vector<1x1x8x256xf32>
      %67 = vector.shape_cast %66 : vector<1x1x8x256xf32> to vector<8x256xf32>
      %68 = vector.extract_strided_slice %0 {offsets = [5, 0], sizes = [1, 256], strides = [1, 1]} : vector<25x256xf32> to vector<1x256xf32>
      %69 = vector.broadcast %68 : vector<1x256xf32> to vector<8x256xf32>
      %70 = arith.mulf %67, %69 : vector<8x256xf32>
      %71 = arith.addf %62, %70 : vector<8x256xf32>
      %c0_43 = arith.constant 0 : index
      %72 = arith.index_cast %64 : i32 to index
      %c0_44 = arith.constant 0 : index
      %c0_45 = arith.constant 0 : index
      %73 = vector.load %arg2[%c0_43, %72, %c0_44, %c0_45] : memref<2x20x10x256xf32, #tpu.memory_space<vmem>>, vector<1x1x8x256xf32>
      %74 = vector.shape_cast %73 : vector<1x1x8x256xf32> to vector<8x256xf32>
      %75 = vector.extract_strided_slice %0 {offsets = [6, 0], sizes = [1, 256], strides = [1, 1]} : vector<25x256xf32> to vector<1x256xf32>
      %76 = vector.broadcast %75 : vector<1x256xf32> to vector<8x256xf32>
      %77 = arith.mulf %74, %76 : vector<8x256xf32>
      %78 = arith.addf %71, %77 : vector<8x256xf32>
      %c0_46 = arith.constant 0 : index
      %79 = arith.index_cast %64 : i32 to index
      %c1_47 = arith.constant 1 : index
      %c0_48 = arith.constant 0 : index
      %80 = vector.load %arg1[%c0_46, %79, %c1_47, %c0_48] : memref<2x20x10x256xf32, #tpu.memory_space<vmem>>, vector<1x1x8x256xf32>
      %81 = vector.shape_cast %80 : vector<1x1x8x256xf32> to vector<8x256xf32>
      %82 = vector.extract_strided_slice %0 {offsets = [7, 0], sizes = [1, 256], strides = [1, 1]} : vector<25x256xf32> to vector<1x256xf32>
      %83 = vector.broadcast %82 : vector<1x256xf32> to vector<8x256xf32>
      %84 = arith.mulf %81, %83 : vector<8x256xf32>
      %85 = arith.addf %78, %84 : vector<8x256xf32>
      %c0_49 = arith.constant 0 : index
      %86 = arith.index_cast %64 : i32 to index
      %c1_50 = arith.constant 1 : index
      %c0_51 = arith.constant 0 : index
      %87 = vector.load %arg2[%c0_49, %86, %c1_50, %c0_51] : memref<2x20x10x256xf32, #tpu.memory_space<vmem>>, vector<1x1x8x256xf32>
      %88 = vector.shape_cast %87 : vector<1x1x8x256xf32> to vector<8x256xf32>
      %89 = vector.extract_strided_slice %0 {offsets = [8, 0], sizes = [1, 256], strides = [1, 1]} : vector<25x256xf32> to vector<1x256xf32>
      %90 = vector.broadcast %89 : vector<1x256xf32> to vector<8x256xf32>
      %91 = arith.mulf %88, %90 : vector<8x256xf32>
      %92 = arith.addf %85, %91 : vector<8x256xf32>
      %c0_52 = arith.constant 0 : index
      %93 = arith.index_cast %64 : i32 to index
      %c2_53 = arith.constant 2 : index
      %c0_54 = arith.constant 0 : index
      %94 = vector.load %arg1[%c0_52, %93, %c2_53, %c0_54] : memref<2x20x10x256xf32, #tpu.memory_space<vmem>>, vector<1x1x8x256xf32>
      %95 = vector.shape_cast %94 : vector<1x1x8x256xf32> to vector<8x256xf32>
      %96 = vector.extract_strided_slice %0 {offsets = [9, 0], sizes = [1, 256], strides = [1, 1]} : vector<25x256xf32> to vector<1x256xf32>
      %97 = vector.broadcast %96 : vector<1x256xf32> to vector<8x256xf32>
      %98 = arith.mulf %95, %97 : vector<8x256xf32>
      %99 = arith.addf %92, %98 : vector<8x256xf32>
      %c2_i32_55 = arith.constant 2 : i32
      %100 = arith.muli %c2_i32_55, %arg7 : i32
      %c2_i32_56 = arith.constant 2 : i32
      %101 = arith.addi %100, %c2_i32_56 : i32
      %c0_57 = arith.constant 0 : index
      %102 = arith.index_cast %101 : i32 to index
      %c0_58 = arith.constant 0 : index
      %c0_59 = arith.constant 0 : index
      %103 = vector.load %arg1[%c0_57, %102, %c0_58, %c0_59] : memref<2x20x10x256xf32, #tpu.memory_space<vmem>>, vector<1x1x8x256xf32>
      %104 = vector.shape_cast %103 : vector<1x1x8x256xf32> to vector<8x256xf32>
      %105 = vector.extract_strided_slice %0 {offsets = [10, 0], sizes = [1, 256], strides = [1, 1]} : vector<25x256xf32> to vector<1x256xf32>
      %106 = vector.broadcast %105 : vector<1x256xf32> to vector<8x256xf32>
      %107 = arith.mulf %104, %106 : vector<8x256xf32>
      %108 = arith.addf %99, %107 : vector<8x256xf32>
      %c0_60 = arith.constant 0 : index
      %109 = arith.index_cast %101 : i32 to index
      %c0_61 = arith.constant 0 : index
      %c0_62 = arith.constant 0 : index
      %110 = vector.load %arg2[%c0_60, %109, %c0_61, %c0_62] : memref<2x20x10x256xf32, #tpu.memory_space<vmem>>, vector<1x1x8x256xf32>
      %111 = vector.shape_cast %110 : vector<1x1x8x256xf32> to vector<8x256xf32>
      %112 = vector.extract_strided_slice %0 {offsets = [11, 0], sizes = [1, 256], strides = [1, 1]} : vector<25x256xf32> to vector<1x256xf32>
      %113 = vector.broadcast %112 : vector<1x256xf32> to vector<8x256xf32>
      %114 = arith.mulf %111, %113 : vector<8x256xf32>
      %115 = arith.addf %108, %114 : vector<8x256xf32>
      %c0_63 = arith.constant 0 : index
      %116 = arith.index_cast %101 : i32 to index
      %c1_64 = arith.constant 1 : index
      %c0_65 = arith.constant 0 : index
      %117 = vector.load %arg1[%c0_63, %116, %c1_64, %c0_65] : memref<2x20x10x256xf32, #tpu.memory_space<vmem>>, vector<1x1x8x256xf32>
      %118 = vector.shape_cast %117 : vector<1x1x8x256xf32> to vector<8x256xf32>
      %119 = vector.extract_strided_slice %0 {offsets = [12, 0], sizes = [1, 256], strides = [1, 1]} : vector<25x256xf32> to vector<1x256xf32>
      %120 = vector.broadcast %119 : vector<1x256xf32> to vector<8x256xf32>
      %121 = arith.mulf %118, %120 : vector<8x256xf32>
      %122 = arith.addf %115, %121 : vector<8x256xf32>
      %c0_66 = arith.constant 0 : index
      %123 = arith.index_cast %101 : i32 to index
      %c1_67 = arith.constant 1 : index
      %c0_68 = arith.constant 0 : index
      %124 = vector.load %arg2[%c0_66, %123, %c1_67, %c0_68] : memref<2x20x10x256xf32, #tpu.memory_space<vmem>>, vector<1x1x8x256xf32>
      %125 = vector.shape_cast %124 : vector<1x1x8x256xf32> to vector<8x256xf32>
      %126 = vector.extract_strided_slice %0 {offsets = [13, 0], sizes = [1, 256], strides = [1, 1]} : vector<25x256xf32> to vector<1x256xf32>
      %127 = vector.broadcast %126 : vector<1x256xf32> to vector<8x256xf32>
      %128 = arith.mulf %125, %127 : vector<8x256xf32>
      %129 = arith.addf %122, %128 : vector<8x256xf32>
      %c0_69 = arith.constant 0 : index
      %130 = arith.index_cast %101 : i32 to index
      %c2_70 = arith.constant 2 : index
      %c0_71 = arith.constant 0 : index
      %131 = vector.load %arg1[%c0_69, %130, %c2_70, %c0_71] : memref<2x20x10x256xf32, #tpu.memory_space<vmem>>, vector<1x1x8x256xf32>
      %132 = vector.shape_cast %131 : vector<1x1x8x256xf32> to vector<8x256xf32>
      %133 = vector.extract_strided_slice %0 {offsets = [14, 0], sizes = [1, 256], strides = [1, 1]} : vector<25x256xf32> to vector<1x256xf32>
      %134 = vector.broadcast %133 : vector<1x256xf32> to vector<8x256xf32>
      %135 = arith.mulf %132, %134 : vector<8x256xf32>
      %136 = arith.addf %129, %135 : vector<8x256xf32>
      %c2_i32_72 = arith.constant 2 : i32
      %137 = arith.muli %c2_i32_72, %arg7 : i32
      %c3_i32 = arith.constant 3 : i32
      %138 = arith.addi %137, %c3_i32 : i32
      %c0_73 = arith.constant 0 : index
      %139 = arith.index_cast %138 : i32 to index
      %c0_74 = arith.constant 0 : index
      %c0_75 = arith.constant 0 : index
      %140 = vector.load %arg1[%c0_73, %139, %c0_74, %c0_75] : memref<2x20x10x256xf32, #tpu.memory_space<vmem>>, vector<1x1x8x256xf32>
      %141 = vector.shape_cast %140 : vector<1x1x8x256xf32> to vector<8x256xf32>
      %142 = vector.extract_strided_slice %0 {offsets = [15, 0], sizes = [1, 256], strides = [1, 1]} : vector<25x256xf32> to vector<1x256xf32>
      %143 = vector.broadcast %142 : vector<1x256xf32> to vector<8x256xf32>
      %144 = arith.mulf %141, %143 : vector<8x256xf32>
      %145 = arith.addf %136, %144 : vector<8x256xf32>
      %c0_76 = arith.constant 0 : index
      %146 = arith.index_cast %138 : i32 to index
      %c0_77 = arith.constant 0 : index
      %c0_78 = arith.constant 0 : index
      %147 = vector.load %arg2[%c0_76, %146, %c0_77, %c0_78] : memref<2x20x10x256xf32, #tpu.memory_space<vmem>>, vector<1x1x8x256xf32>
      %148 = vector.shape_cast %147 : vector<1x1x8x256xf32> to vector<8x256xf32>
      %149 = vector.extract_strided_slice %0 {offsets = [16, 0], sizes = [1, 256], strides = [1, 1]} : vector<25x256xf32> to vector<1x256xf32>
      %150 = vector.broadcast %149 : vector<1x256xf32> to vector<8x256xf32>
      %151 = arith.mulf %148, %150 : vector<8x256xf32>
      %152 = arith.addf %145, %151 : vector<8x256xf32>
      %c0_79 = arith.constant 0 : index
      %153 = arith.index_cast %138 : i32 to index
      %c1_80 = arith.constant 1 : index
      %c0_81 = arith.constant 0 : index
      %154 = vector.load %arg1[%c0_79, %153, %c1_80, %c0_81] : memref<2x20x10x256xf32, #tpu.memory_space<vmem>>, vector<1x1x8x256xf32>
      %155 = vector.shape_cast %154 : vector<1x1x8x256xf32> to vector<8x256xf32>
      %156 = vector.extract_strided_slice %0 {offsets = [17, 0], sizes = [1, 256], strides = [1, 1]} : vector<25x256xf32> to vector<1x256xf32>
      %157 = vector.broadcast %156 : vector<1x256xf32> to vector<8x256xf32>
      %158 = arith.mulf %155, %157 : vector<8x256xf32>
      %159 = arith.addf %152, %158 : vector<8x256xf32>
      %c0_82 = arith.constant 0 : index
      %160 = arith.index_cast %138 : i32 to index
      %c1_83 = arith.constant 1 : index
      %c0_84 = arith.constant 0 : index
      %161 = vector.load %arg2[%c0_82, %160, %c1_83, %c0_84] : memref<2x20x10x256xf32, #tpu.memory_space<vmem>>, vector<1x1x8x256xf32>
      %162 = vector.shape_cast %161 : vector<1x1x8x256xf32> to vector<8x256xf32>
      %163 = vector.extract_strided_slice %0 {offsets = [18, 0], sizes = [1, 256], strides = [1, 1]} : vector<25x256xf32> to vector<1x256xf32>
      %164 = vector.broadcast %163 : vector<1x256xf32> to vector<8x256xf32>
      %165 = arith.mulf %162, %164 : vector<8x256xf32>
      %166 = arith.addf %159, %165 : vector<8x256xf32>
      %c0_85 = arith.constant 0 : index
      %167 = arith.index_cast %138 : i32 to index
      %c2_86 = arith.constant 2 : index
      %c0_87 = arith.constant 0 : index
      %168 = vector.load %arg1[%c0_85, %167, %c2_86, %c0_87] : memref<2x20x10x256xf32, #tpu.memory_space<vmem>>, vector<1x1x8x256xf32>
      %169 = vector.shape_cast %168 : vector<1x1x8x256xf32> to vector<8x256xf32>
      %170 = vector.extract_strided_slice %0 {offsets = [19, 0], sizes = [1, 256], strides = [1, 1]} : vector<25x256xf32> to vector<1x256xf32>
      %171 = vector.broadcast %170 : vector<1x256xf32> to vector<8x256xf32>
      %172 = arith.mulf %169, %171 : vector<8x256xf32>
      %173 = arith.addf %166, %172 : vector<8x256xf32>
      %c2_i32_88 = arith.constant 2 : i32
      %174 = arith.muli %c2_i32_88, %arg7 : i32
      %c4_i32 = arith.constant 4 : i32
      %175 = arith.addi %174, %c4_i32 : i32
      %c0_89 = arith.constant 0 : index
      %176 = arith.index_cast %175 : i32 to index
      %c0_90 = arith.constant 0 : index
      %c0_91 = arith.constant 0 : index
      %177 = vector.load %arg1[%c0_89, %176, %c0_90, %c0_91] : memref<2x20x10x256xf32, #tpu.memory_space<vmem>>, vector<1x1x8x256xf32>
      %178 = vector.shape_cast %177 : vector<1x1x8x256xf32> to vector<8x256xf32>
      %179 = vector.extract_strided_slice %0 {offsets = [20, 0], sizes = [1, 256], strides = [1, 1]} : vector<25x256xf32> to vector<1x256xf32>
      %180 = vector.broadcast %179 : vector<1x256xf32> to vector<8x256xf32>
      %181 = arith.mulf %178, %180 : vector<8x256xf32>
      %182 = arith.addf %173, %181 : vector<8x256xf32>
      %c0_92 = arith.constant 0 : index
      %183 = arith.index_cast %175 : i32 to index
      %c0_93 = arith.constant 0 : index
      %c0_94 = arith.constant 0 : index
      %184 = vector.load %arg2[%c0_92, %183, %c0_93, %c0_94] : memref<2x20x10x256xf32, #tpu.memory_space<vmem>>, vector<1x1x8x256xf32>
      %185 = vector.shape_cast %184 : vector<1x1x8x256xf32> to vector<8x256xf32>
      %186 = vector.extract_strided_slice %0 {offsets = [21, 0], sizes = [1, 256], strides = [1, 1]} : vector<25x256xf32> to vector<1x256xf32>
      %187 = vector.broadcast %186 : vector<1x256xf32> to vector<8x256xf32>
      %188 = arith.mulf %185, %187 : vector<8x256xf32>
      %189 = arith.addf %182, %188 : vector<8x256xf32>
      %c0_95 = arith.constant 0 : index
      %190 = arith.index_cast %175 : i32 to index
      %c1_96 = arith.constant 1 : index
      %c0_97 = arith.constant 0 : index
      %191 = vector.load %arg1[%c0_95, %190, %c1_96, %c0_97] : memref<2x20x10x256xf32, #tpu.memory_space<vmem>>, vector<1x1x8x256xf32>
      %192 = vector.shape_cast %191 : vector<1x1x8x256xf32> to vector<8x256xf32>
      %193 = vector.extract_strided_slice %0 {offsets = [22, 0], sizes = [1, 256], strides = [1, 1]} : vector<25x256xf32> to vector<1x256xf32>
      %194 = vector.broadcast %193 : vector<1x256xf32> to vector<8x256xf32>
      %195 = arith.mulf %192, %194 : vector<8x256xf32>
      %196 = arith.addf %189, %195 : vector<8x256xf32>
      %c0_98 = arith.constant 0 : index
      %197 = arith.index_cast %175 : i32 to index
      %c1_99 = arith.constant 1 : index
      %c0_100 = arith.constant 0 : index
      %198 = vector.load %arg2[%c0_98, %197, %c1_99, %c0_100] : memref<2x20x10x256xf32, #tpu.memory_space<vmem>>, vector<1x1x8x256xf32>
      %199 = vector.shape_cast %198 : vector<1x1x8x256xf32> to vector<8x256xf32>
      %200 = vector.extract_strided_slice %0 {offsets = [23, 0], sizes = [1, 256], strides = [1, 1]} : vector<25x256xf32> to vector<1x256xf32>
      %201 = vector.broadcast %200 : vector<1x256xf32> to vector<8x256xf32>
      %202 = arith.mulf %199, %201 : vector<8x256xf32>
      %203 = arith.addf %196, %202 : vector<8x256xf32>
      %c0_101 = arith.constant 0 : index
      %204 = arith.index_cast %175 : i32 to index
      %c2_102 = arith.constant 2 : index
      %c0_103 = arith.constant 0 : index
      %205 = vector.load %arg1[%c0_101, %204, %c2_102, %c0_103] : memref<2x20x10x256xf32, #tpu.memory_space<vmem>>, vector<1x1x8x256xf32>
      %206 = vector.shape_cast %205 : vector<1x1x8x256xf32> to vector<8x256xf32>
      %207 = vector.extract_strided_slice %0 {offsets = [24, 0], sizes = [1, 256], strides = [1, 1]} : vector<25x256xf32> to vector<1x256xf32>
      %208 = vector.broadcast %207 : vector<1x256xf32> to vector<8x256xf32>
      %209 = arith.mulf %206, %208 : vector<8x256xf32>
      %210 = arith.addf %203, %209 : vector<8x256xf32>
      %c0_104 = arith.constant 0 : index
      %211 = arith.index_cast %arg7 : i32 to index
      %c0_105 = arith.constant 0 : index
      %c0_106 = arith.constant 0 : index
      %212 = vector.load %arg6[%c0_104, %211, %c0_105, %c0_106] : memref<2x8x8x256xf32, #tpu.memory_space<vmem>>, vector<1x1x8x256xf32>
      %213 = vector.shape_cast %212 : vector<1x1x8x256xf32> to vector<8x256xf32>
      %214 = vector.shape_cast %210 : vector<8x256xf32> to vector<1x1x8x256xf32>
      tpu.vector_store %arg6[%c0_104, %211, %c0_105, %c0_106], %214 {strides = array<i32>} : memref<2x8x8x256xf32, #tpu.memory_space<vmem>>, vector<1x1x8x256xf32>,
      %cst_107 = arith.constant dense<0.000000e+00> : vector<256xf32>
      %215 = vector.multi_reduction <add>, %210, %cst_107 [0] : vector<8x256xf32> to vector<256xf32>
      %216 = vector.shape_cast %215 : vector<256xf32> to vector<1x256xf32>
      %217 = arith.addf %arg8, %216 : vector<1x256xf32>
      %218 = arith.mulf %210, %210 : vector<8x256xf32>
      %cst_108 = arith.constant dense<0.000000e+00> : vector<256xf32>
      %219 = vector.multi_reduction <add>, %218, %cst_108 [0] : vector<8x256xf32> to vector<256xf32>
      %220 = vector.shape_cast %219 : vector<256xf32> to vector<1x256xf32>
      %221 = arith.addf %arg9, %220 : vector<1x256xf32>
      scf.yield %217, %221 : vector<1x256xf32>, vector<1x256xf32>
    }
    %c8_i32_2 = arith.constant 8 : i32
    %c0_i32_3 = arith.constant 0 : i32
    %c8_i32_4 = arith.constant 8 : i32
    %5 = arith.addi %c0_i32_3, %c8_i32_4 : i32
    %c1_i32_5 = arith.constant 1 : i32
    %6:2 = scf.for %arg7 = %c0_i32_3 to %5 step %c1_i32_5 iter_args(%arg8 = %4#0, %arg9 = %4#1) -> (vector<1x256xf32>, vector<1x256xf32>)  : i32 {
      %cst_23 = arith.constant 0.000000e+00 : f32
      %25 = vector.broadcast %cst_23 : f32 to vector<8x256xf32>
      %c2_i32 = arith.constant 2 : i32
      %26 = arith.muli %c2_i32, %arg7 : i32
      %c0_i32_24 = arith.constant 0 : i32
      %27 = arith.addi %26, %c0_i32_24 : i32
      %c1 = arith.constant 1 : index
      %28 = arith.index_cast %27 : i32 to index
      %c0_25 = arith.constant 0 : index
      %c0_26 = arith.constant 0 : index
      %29 = vector.load %arg1[%c1, %28, %c0_25, %c0_26] : memref<2x20x10x256xf32, #tpu.memory_space<vmem>>, vector<1x1x8x256xf32>
      %30 = vector.shape_cast %29 : vector<1x1x8x256xf32> to vector<8x256xf32>
      %31 = vector.extract_strided_slice %0 {offsets = [0, 0], sizes = [1, 256], strides = [1, 1]} : vector<25x256xf32> to vector<1x256xf32>
      %32 = vector.broadcast %31 : vector<1x256xf32> to vector<8x256xf32>
      %33 = arith.mulf %30, %32 : vector<8x256xf32>
      %34 = arith.addf %25, %33 : vector<8x256xf32>
      %c1_27 = arith.constant 1 : index
      %35 = arith.index_cast %27 : i32 to index
      %c0_28 = arith.constant 0 : index
      %c0_29 = arith.constant 0 : index
      %36 = vector.load %arg2[%c1_27, %35, %c0_28, %c0_29] : memref<2x20x10x256xf32, #tpu.memory_space<vmem>>, vector<1x1x8x256xf32>
      %37 = vector.shape_cast %36 : vector<1x1x8x256xf32> to vector<8x256xf32>
      %38 = vector.extract_strided_slice %0 {offsets = [1, 0], sizes = [1, 256], strides = [1, 1]} : vector<25x256xf32> to vector<1x256xf32>
      %39 = vector.broadcast %38 : vector<1x256xf32> to vector<8x256xf32>
      %40 = arith.mulf %37, %39 : vector<8x256xf32>
      %41 = arith.addf %34, %40 : vector<8x256xf32>
      %c1_30 = arith.constant 1 : index
      %42 = arith.index_cast %27 : i32 to index
      %c1_31 = arith.constant 1 : index
      %c0_32 = arith.constant 0 : index
      %43 = vector.load %arg1[%c1_30, %42, %c1_31, %c0_32] : memref<2x20x10x256xf32, #tpu.memory_space<vmem>>, vector<1x1x8x256xf32>
      %44 = vector.shape_cast %43 : vector<1x1x8x256xf32> to vector<8x256xf32>
      %45 = vector.extract_strided_slice %0 {offsets = [2, 0], sizes = [1, 256], strides = [1, 1]} : vector<25x256xf32> to vector<1x256xf32>
      %46 = vector.broadcast %45 : vector<1x256xf32> to vector<8x256xf32>
      %47 = arith.mulf %44, %46 : vector<8x256xf32>
      %48 = arith.addf %41, %47 : vector<8x256xf32>
      %c1_33 = arith.constant 1 : index
      %49 = arith.index_cast %27 : i32 to index
      %c1_34 = arith.constant 1 : index
      %c0_35 = arith.constant 0 : index
      %50 = vector.load %arg2[%c1_33, %49, %c1_34, %c0_35] : memref<2x20x10x256xf32, #tpu.memory_space<vmem>>, vector<1x1x8x256xf32>
      %51 = vector.shape_cast %50 : vector<1x1x8x256xf32> to vector<8x256xf32>
      %52 = vector.extract_strided_slice %0 {offsets = [3, 0], sizes = [1, 256], strides = [1, 1]} : vector<25x256xf32> to vector<1x256xf32>
      %53 = vector.broadcast %52 : vector<1x256xf32> to vector<8x256xf32>
      %54 = arith.mulf %51, %53 : vector<8x256xf32>
      %55 = arith.addf %48, %54 : vector<8x256xf32>
      %c1_36 = arith.constant 1 : index
      %56 = arith.index_cast %27 : i32 to index
      %c2 = arith.constant 2 : index
      %c0_37 = arith.constant 0 : index
      %57 = vector.load %arg1[%c1_36, %56, %c2, %c0_37] : memref<2x20x10x256xf32, #tpu.memory_space<vmem>>, vector<1x1x8x256xf32>
      %58 = vector.shape_cast %57 : vector<1x1x8x256xf32> to vector<8x256xf32>
      %59 = vector.extract_strided_slice %0 {offsets = [4, 0], sizes = [1, 256], strides = [1, 1]} : vector<25x256xf32> to vector<1x256xf32>
      %60 = vector.broadcast %59 : vector<1x256xf32> to vector<8x256xf32>
      %61 = arith.mulf %58, %60 : vector<8x256xf32>
      %62 = arith.addf %55, %61 : vector<8x256xf32>
      %c2_i32_38 = arith.constant 2 : i32
      %63 = arith.muli %c2_i32_38, %arg7 : i32
      %c1_i32_39 = arith.constant 1 : i32
      %64 = arith.addi %63, %c1_i32_39 : i32
      %c1_40 = arith.constant 1 : index
      %65 = arith.index_cast %64 : i32 to index
      %c0_41 = arith.constant 0 : index
      %c0_42 = arith.constant 0 : index
      %66 = vector.load %arg1[%c1_40, %65, %c0_41, %c0_42] : memref<2x20x10x256xf32, #tpu.memory_space<vmem>>, vector<1x1x8x256xf32>
      %67 = vector.shape_cast %66 : vector<1x1x8x256xf32> to vector<8x256xf32>
      %68 = vector.extract_strided_slice %0 {offsets = [5, 0], sizes = [1, 256], strides = [1, 1]} : vector<25x256xf32> to vector<1x256xf32>
      %69 = vector.broadcast %68 : vector<1x256xf32> to vector<8x256xf32>
      %70 = arith.mulf %67, %69 : vector<8x256xf32>
      %71 = arith.addf %62, %70 : vector<8x256xf32>
      %c1_43 = arith.constant 1 : index
      %72 = arith.index_cast %64 : i32 to index
      %c0_44 = arith.constant 0 : index
      %c0_45 = arith.constant 0 : index
      %73 = vector.load %arg2[%c1_43, %72, %c0_44, %c0_45] : memref<2x20x10x256xf32, #tpu.memory_space<vmem>>, vector<1x1x8x256xf32>
      %74 = vector.shape_cast %73 : vector<1x1x8x256xf32> to vector<8x256xf32>
      %75 = vector.extract_strided_slice %0 {offsets = [6, 0], sizes = [1, 256], strides = [1, 1]} : vector<25x256xf32> to vector<1x256xf32>
      %76 = vector.broadcast %75 : vector<1x256xf32> to vector<8x256xf32>
      %77 = arith.mulf %74, %76 : vector<8x256xf32>
      %78 = arith.addf %71, %77 : vector<8x256xf32>
      %c1_46 = arith.constant 1 : index
      %79 = arith.index_cast %64 : i32 to index
      %c1_47 = arith.constant 1 : index
      %c0_48 = arith.constant 0 : index
      %80 = vector.load %arg1[%c1_46, %79, %c1_47, %c0_48] : memref<2x20x10x256xf32, #tpu.memory_space<vmem>>, vector<1x1x8x256xf32>
      %81 = vector.shape_cast %80 : vector<1x1x8x256xf32> to vector<8x256xf32>
      %82 = vector.extract_strided_slice %0 {offsets = [7, 0], sizes = [1, 256], strides = [1, 1]} : vector<25x256xf32> to vector<1x256xf32>
      %83 = vector.broadcast %82 : vector<1x256xf32> to vector<8x256xf32>
      %84 = arith.mulf %81, %83 : vector<8x256xf32>
      %85 = arith.addf %78, %84 : vector<8x256xf32>
      %c1_49 = arith.constant 1 : index
      %86 = arith.index_cast %64 : i32 to index
      %c1_50 = arith.constant 1 : index
      %c0_51 = arith.constant 0 : index
      %87 = vector.load %arg2[%c1_49, %86, %c1_50, %c0_51] : memref<2x20x10x256xf32, #tpu.memory_space<vmem>>, vector<1x1x8x256xf32>
      %88 = vector.shape_cast %87 : vector<1x1x8x256xf32> to vector<8x256xf32>
      %89 = vector.extract_strided_slice %0 {offsets = [8, 0], sizes = [1, 256], strides = [1, 1]} : vector<25x256xf32> to vector<1x256xf32>
      %90 = vector.broadcast %89 : vector<1x256xf32> to vector<8x256xf32>
      %91 = arith.mulf %88, %90 : vector<8x256xf32>
      %92 = arith.addf %85, %91 : vector<8x256xf32>
      %c1_52 = arith.constant 1 : index
      %93 = arith.index_cast %64 : i32 to index
      %c2_53 = arith.constant 2 : index
      %c0_54 = arith.constant 0 : index
      %94 = vector.load %arg1[%c1_52, %93, %c2_53, %c0_54] : memref<2x20x10x256xf32, #tpu.memory_space<vmem>>, vector<1x1x8x256xf32>
      %95 = vector.shape_cast %94 : vector<1x1x8x256xf32> to vector<8x256xf32>
      %96 = vector.extract_strided_slice %0 {offsets = [9, 0], sizes = [1, 256], strides = [1, 1]} : vector<25x256xf32> to vector<1x256xf32>
      %97 = vector.broadcast %96 : vector<1x256xf32> to vector<8x256xf32>
      %98 = arith.mulf %95, %97 : vector<8x256xf32>
      %99 = arith.addf %92, %98 : vector<8x256xf32>
      %c2_i32_55 = arith.constant 2 : i32
      %100 = arith.muli %c2_i32_55, %arg7 : i32
      %c2_i32_56 = arith.constant 2 : i32
      %101 = arith.addi %100, %c2_i32_56 : i32
      %c1_57 = arith.constant 1 : index
      %102 = arith.index_cast %101 : i32 to index
      %c0_58 = arith.constant 0 : index
      %c0_59 = arith.constant 0 : index
      %103 = vector.load %arg1[%c1_57, %102, %c0_58, %c0_59] : memref<2x20x10x256xf32, #tpu.memory_space<vmem>>, vector<1x1x8x256xf32>
      %104 = vector.shape_cast %103 : vector<1x1x8x256xf32> to vector<8x256xf32>
      %105 = vector.extract_strided_slice %0 {offsets = [10, 0], sizes = [1, 256], strides = [1, 1]} : vector<25x256xf32> to vector<1x256xf32>
      %106 = vector.broadcast %105 : vector<1x256xf32> to vector<8x256xf32>
      %107 = arith.mulf %104, %106 : vector<8x256xf32>
      %108 = arith.addf %99, %107 : vector<8x256xf32>
      %c1_60 = arith.constant 1 : index
      %109 = arith.index_cast %101 : i32 to index
      %c0_61 = arith.constant 0 : index
      %c0_62 = arith.constant 0 : index
      %110 = vector.load %arg2[%c1_60, %109, %c0_61, %c0_62] : memref<2x20x10x256xf32, #tpu.memory_space<vmem>>, vector<1x1x8x256xf32>
      %111 = vector.shape_cast %110 : vector<1x1x8x256xf32> to vector<8x256xf32>
      %112 = vector.extract_strided_slice %0 {offsets = [11, 0], sizes = [1, 256], strides = [1, 1]} : vector<25x256xf32> to vector<1x256xf32>
      %113 = vector.broadcast %112 : vector<1x256xf32> to vector<8x256xf32>
      %114 = arith.mulf %111, %113 : vector<8x256xf32>
      %115 = arith.addf %108, %114 : vector<8x256xf32>
      %c1_63 = arith.constant 1 : index
      %116 = arith.index_cast %101 : i32 to index
      %c1_64 = arith.constant 1 : index
      %c0_65 = arith.constant 0 : index
      %117 = vector.load %arg1[%c1_63, %116, %c1_64, %c0_65] : memref<2x20x10x256xf32, #tpu.memory_space<vmem>>, vector<1x1x8x256xf32>
      %118 = vector.shape_cast %117 : vector<1x1x8x256xf32> to vector<8x256xf32>
      %119 = vector.extract_strided_slice %0 {offsets = [12, 0], sizes = [1, 256], strides = [1, 1]} : vector<25x256xf32> to vector<1x256xf32>
      %120 = vector.broadcast %119 : vector<1x256xf32> to vector<8x256xf32>
      %121 = arith.mulf %118, %120 : vector<8x256xf32>
      %122 = arith.addf %115, %121 : vector<8x256xf32>
      %c1_66 = arith.constant 1 : index
      %123 = arith.index_cast %101 : i32 to index
      %c1_67 = arith.constant 1 : index
      %c0_68 = arith.constant 0 : index
      %124 = vector.load %arg2[%c1_66, %123, %c1_67, %c0_68] : memref<2x20x10x256xf32, #tpu.memory_space<vmem>>, vector<1x1x8x256xf32>
      %125 = vector.shape_cast %124 : vector<1x1x8x256xf32> to vector<8x256xf32>
      %126 = vector.extract_strided_slice %0 {offsets = [13, 0], sizes = [1, 256], strides = [1, 1]} : vector<25x256xf32> to vector<1x256xf32>
      %127 = vector.broadcast %126 : vector<1x256xf32> to vector<8x256xf32>
      %128 = arith.mulf %125, %127 : vector<8x256xf32>
      %129 = arith.addf %122, %128 : vector<8x256xf32>
      %c1_69 = arith.constant 1 : index
      %130 = arith.index_cast %101 : i32 to index
      %c2_70 = arith.constant 2 : index
      %c0_71 = arith.constant 0 : index
      %131 = vector.load %arg1[%c1_69, %130, %c2_70, %c0_71] : memref<2x20x10x256xf32, #tpu.memory_space<vmem>>, vector<1x1x8x256xf32>
      %132 = vector.shape_cast %131 : vector<1x1x8x256xf32> to vector<8x256xf32>
      %133 = vector.extract_strided_slice %0 {offsets = [14, 0], sizes = [1, 256], strides = [1, 1]} : vector<25x256xf32> to vector<1x256xf32>
      %134 = vector.broadcast %133 : vector<1x256xf32> to vector<8x256xf32>
      %135 = arith.mulf %132, %134 : vector<8x256xf32>
      %136 = arith.addf %129, %135 : vector<8x256xf32>
      %c2_i32_72 = arith.constant 2 : i32
      %137 = arith.muli %c2_i32_72, %arg7 : i32
      %c3_i32 = arith.constant 3 : i32
      %138 = arith.addi %137, %c3_i32 : i32
      %c1_73 = arith.constant 1 : index
      %139 = arith.index_cast %138 : i32 to index
      %c0_74 = arith.constant 0 : index
      %c0_75 = arith.constant 0 : index
      %140 = vector.load %arg1[%c1_73, %139, %c0_74, %c0_75] : memref<2x20x10x256xf32, #tpu.memory_space<vmem>>, vector<1x1x8x256xf32>
      %141 = vector.shape_cast %140 : vector<1x1x8x256xf32> to vector<8x256xf32>
      %142 = vector.extract_strided_slice %0 {offsets = [15, 0], sizes = [1, 256], strides = [1, 1]} : vector<25x256xf32> to vector<1x256xf32>
      %143 = vector.broadcast %142 : vector<1x256xf32> to vector<8x256xf32>
      %144 = arith.mulf %141, %143 : vector<8x256xf32>
      %145 = arith.addf %136, %144 : vector<8x256xf32>
      %c1_76 = arith.constant 1 : index
      %146 = arith.index_cast %138 : i32 to index
      %c0_77 = arith.constant 0 : index
      %c0_78 = arith.constant 0 : index
      %147 = vector.load %arg2[%c1_76, %146, %c0_77, %c0_78] : memref<2x20x10x256xf32, #tpu.memory_space<vmem>>, vector<1x1x8x256xf32>
      %148 = vector.shape_cast %147 : vector<1x1x8x256xf32> to vector<8x256xf32>
      %149 = vector.extract_strided_slice %0 {offsets = [16, 0], sizes = [1, 256], strides = [1, 1]} : vector<25x256xf32> to vector<1x256xf32>
      %150 = vector.broadcast %149 : vector<1x256xf32> to vector<8x256xf32>
      %151 = arith.mulf %148, %150 : vector<8x256xf32>
      %152 = arith.addf %145, %151 : vector<8x256xf32>
      %c1_79 = arith.constant 1 : index
      %153 = arith.index_cast %138 : i32 to index
      %c1_80 = arith.constant 1 : index
      %c0_81 = arith.constant 0 : index
      %154 = vector.load %arg1[%c1_79, %153, %c1_80, %c0_81] : memref<2x20x10x256xf32, #tpu.memory_space<vmem>>, vector<1x1x8x256xf32>
      %155 = vector.shape_cast %154 : vector<1x1x8x256xf32> to vector<8x256xf32>
      %156 = vector.extract_strided_slice %0 {offsets = [17, 0], sizes = [1, 256], strides = [1, 1]} : vector<25x256xf32> to vector<1x256xf32>
      %157 = vector.broadcast %156 : vector<1x256xf32> to vector<8x256xf32>
      %158 = arith.mulf %155, %157 : vector<8x256xf32>
      %159 = arith.addf %152, %158 : vector<8x256xf32>
      %c1_82 = arith.constant 1 : index
      %160 = arith.index_cast %138 : i32 to index
      %c1_83 = arith.constant 1 : index
      %c0_84 = arith.constant 0 : index
      %161 = vector.load %arg2[%c1_82, %160, %c1_83, %c0_84] : memref<2x20x10x256xf32, #tpu.memory_space<vmem>>, vector<1x1x8x256xf32>
      %162 = vector.shape_cast %161 : vector<1x1x8x256xf32> to vector<8x256xf32>
      %163 = vector.extract_strided_slice %0 {offsets = [18, 0], sizes = [1, 256], strides = [1, 1]} : vector<25x256xf32> to vector<1x256xf32>
      %164 = vector.broadcast %163 : vector<1x256xf32> to vector<8x256xf32>
      %165 = arith.mulf %162, %164 : vector<8x256xf32>
      %166 = arith.addf %159, %165 : vector<8x256xf32>
      %c1_85 = arith.constant 1 : index
      %167 = arith.index_cast %138 : i32 to index
      %c2_86 = arith.constant 2 : index
      %c0_87 = arith.constant 0 : index
      %168 = vector.load %arg1[%c1_85, %167, %c2_86, %c0_87] : memref<2x20x10x256xf32, #tpu.memory_space<vmem>>, vector<1x1x8x256xf32>
      %169 = vector.shape_cast %168 : vector<1x1x8x256xf32> to vector<8x256xf32>
      %170 = vector.extract_strided_slice %0 {offsets = [19, 0], sizes = [1, 256], strides = [1, 1]} : vector<25x256xf32> to vector<1x256xf32>
      %171 = vector.broadcast %170 : vector<1x256xf32> to vector<8x256xf32>
      %172 = arith.mulf %169, %171 : vector<8x256xf32>
      %173 = arith.addf %166, %172 : vector<8x256xf32>
      %c2_i32_88 = arith.constant 2 : i32
      %174 = arith.muli %c2_i32_88, %arg7 : i32
      %c4_i32 = arith.constant 4 : i32
      %175 = arith.addi %174, %c4_i32 : i32
      %c1_89 = arith.constant 1 : index
      %176 = arith.index_cast %175 : i32 to index
      %c0_90 = arith.constant 0 : index
      %c0_91 = arith.constant 0 : index
      %177 = vector.load %arg1[%c1_89, %176, %c0_90, %c0_91] : memref<2x20x10x256xf32, #tpu.memory_space<vmem>>, vector<1x1x8x256xf32>
      %178 = vector.shape_cast %177 : vector<1x1x8x256xf32> to vector<8x256xf32>
      %179 = vector.extract_strided_slice %0 {offsets = [20, 0], sizes = [1, 256], strides = [1, 1]} : vector<25x256xf32> to vector<1x256xf32>
      %180 = vector.broadcast %179 : vector<1x256xf32> to vector<8x256xf32>
      %181 = arith.mulf %178, %180 : vector<8x256xf32>
      %182 = arith.addf %173, %181 : vector<8x256xf32>
      %c1_92 = arith.constant 1 : index
      %183 = arith.index_cast %175 : i32 to index
      %c0_93 = arith.constant 0 : index
      %c0_94 = arith.constant 0 : index
      %184 = vector.load %arg2[%c1_92, %183, %c0_93, %c0_94] : memref<2x20x10x256xf32, #tpu.memory_space<vmem>>, vector<1x1x8x256xf32>
      %185 = vector.shape_cast %184 : vector<1x1x8x256xf32> to vector<8x256xf32>
      %186 = vector.extract_strided_slice %0 {offsets = [21, 0], sizes = [1, 256], strides = [1, 1]} : vector<25x256xf32> to vector<1x256xf32>
      %187 = vector.broadcast %186 : vector<1x256xf32> to vector<8x256xf32>
      %188 = arith.mulf %185, %187 : vector<8x256xf32>
      %189 = arith.addf %182, %188 : vector<8x256xf32>
      %c1_95 = arith.constant 1 : index
      %190 = arith.index_cast %175 : i32 to index
      %c1_96 = arith.constant 1 : index
      %c0_97 = arith.constant 0 : index
      %191 = vector.load %arg1[%c1_95, %190, %c1_96, %c0_97] : memref<2x20x10x256xf32, #tpu.memory_space<vmem>>, vector<1x1x8x256xf32>
      %192 = vector.shape_cast %191 : vector<1x1x8x256xf32> to vector<8x256xf32>
      %193 = vector.extract_strided_slice %0 {offsets = [22, 0], sizes = [1, 256], strides = [1, 1]} : vector<25x256xf32> to vector<1x256xf32>
      %194 = vector.broadcast %193 : vector<1x256xf32> to vector<8x256xf32>
      %195 = arith.mulf %192, %194 : vector<8x256xf32>
      %196 = arith.addf %189, %195 : vector<8x256xf32>
      %c1_98 = arith.constant 1 : index
      %197 = arith.index_cast %175 : i32 to index
      %c1_99 = arith.constant 1 : index
      %c0_100 = arith.constant 0 : index
      %198 = vector.load %arg2[%c1_98, %197, %c1_99, %c0_100] : memref<2x20x10x256xf32, #tpu.memory_space<vmem>>, vector<1x1x8x256xf32>
      %199 = vector.shape_cast %198 : vector<1x1x8x256xf32> to vector<8x256xf32>
      %200 = vector.extract_strided_slice %0 {offsets = [23, 0], sizes = [1, 256], strides = [1, 1]} : vector<25x256xf32> to vector<1x256xf32>
      %201 = vector.broadcast %200 : vector<1x256xf32> to vector<8x256xf32>
      %202 = arith.mulf %199, %201 : vector<8x256xf32>
      %203 = arith.addf %196, %202 : vector<8x256xf32>
      %c1_101 = arith.constant 1 : index
      %204 = arith.index_cast %175 : i32 to index
      %c2_102 = arith.constant 2 : index
      %c0_103 = arith.constant 0 : index
      %205 = vector.load %arg1[%c1_101, %204, %c2_102, %c0_103] : memref<2x20x10x256xf32, #tpu.memory_space<vmem>>, vector<1x1x8x256xf32>
      %206 = vector.shape_cast %205 : vector<1x1x8x256xf32> to vector<8x256xf32>
      %207 = vector.extract_strided_slice %0 {offsets = [24, 0], sizes = [1, 256], strides = [1, 1]} : vector<25x256xf32> to vector<1x256xf32>
      %208 = vector.broadcast %207 : vector<1x256xf32> to vector<8x256xf32>
      %209 = arith.mulf %206, %208 : vector<8x256xf32>
      %210 = arith.addf %203, %209 : vector<8x256xf32>
      %c1_104 = arith.constant 1 : index
      %211 = arith.index_cast %arg7 : i32 to index
      %c0_105 = arith.constant 0 : index
      %c0_106 = arith.constant 0 : index
      %212 = vector.load %arg6[%c1_104, %211, %c0_105, %c0_106] : memref<2x8x8x256xf32, #tpu.memory_space<vmem>>, vector<1x1x8x256xf32>
      %213 = vector.shape_cast %212 : vector<1x1x8x256xf32> to vector<8x256xf32>
      %214 = vector.shape_cast %210 : vector<8x256xf32> to vector<1x1x8x256xf32>
      tpu.vector_store %arg6[%c1_104, %211, %c0_105, %c0_106], %214 {strides = array<i32>} : memref<2x8x8x256xf32, #tpu.memory_space<vmem>>, vector<1x1x8x256xf32>,
      %cst_107 = arith.constant dense<0.000000e+00> : vector<256xf32>
      %215 = vector.multi_reduction <add>, %210, %cst_107 [0] : vector<8x256xf32> to vector<256xf32>
      %216 = vector.shape_cast %215 : vector<256xf32> to vector<1x256xf32>
      %217 = arith.addf %arg8, %216 : vector<1x256xf32>
      %218 = arith.mulf %210, %210 : vector<8x256xf32>
      %cst_108 = arith.constant dense<0.000000e+00> : vector<256xf32>
      %219 = vector.multi_reduction <add>, %218, %cst_108 [0] : vector<8x256xf32> to vector<256xf32>
      %220 = vector.shape_cast %219 : vector<256xf32> to vector<1x256xf32>
      %221 = arith.addf %arg9, %220 : vector<1x256xf32>
      scf.yield %217, %221 : vector<1x256xf32>, vector<1x256xf32>
    }
    %c8_i32_6 = arith.constant 8 : i32
    %cst_7 = arith.constant 7.812500e-03 : f32
    %7 = vector.broadcast %cst_7 : f32 to vector<1x256xf32>
    %8 = arith.mulf %6#0, %7 : vector<1x256xf32>
    %cst_8 = arith.constant 7.812500e-03 : f32
    %9 = vector.broadcast %cst_8 : f32 to vector<1x256xf32>
    %10 = arith.mulf %6#1, %9 : vector<1x256xf32>
    %11 = arith.mulf %8, %8 : vector<1x256xf32>
    %12 = arith.subf %10, %11 : vector<1x256xf32>
    %cst_9 = arith.constant 0.000000e+00 : f32
    %13 = vector.broadcast %cst_9 : f32 to vector<1x256xf32>
    %14 = arith.maximumf %12, %13 : vector<1x256xf32>
    %c0_10 = arith.constant 0 : index
    %c0_11 = arith.constant 0 : index
    %15 = vector.load %arg4[%c0_10, %c0_11] : memref<1x256xf32, #tpu.memory_space<vmem>>, vector<1x256xf32>
    %cst_12 = arith.constant 1.000000e-03 : f32
    %16 = vector.broadcast %cst_12 : f32 to vector<1x256xf32>
    %17 = arith.addf %14, %16 : vector<1x256xf32>
    %18 = math.rsqrt %17 : vector<1x256xf32>
    %19 = arith.mulf %15, %18 : vector<1x256xf32>
    %c0_13 = arith.constant 0 : index
    %c0_14 = arith.constant 0 : index
    %20 = vector.load %arg5[%c0_13, %c0_14] : memref<1x256xf32, #tpu.memory_space<vmem>>, vector<1x256xf32>
    %21 = arith.mulf %8, %19 : vector<1x256xf32>
    %22 = arith.subf %20, %21 : vector<1x256xf32>
    %c0_i32_15 = arith.constant 0 : i32
    %c8_i32_16 = arith.constant 8 : i32
    %23 = arith.addi %c0_i32_15, %c8_i32_16 : i32
    %c1_i32_17 = arith.constant 1 : i32
    scf.for %arg7 = %c0_i32_15 to %23 step %c1_i32_17  : i32 {
      %c0_23 = arith.constant 0 : index
      %25 = arith.index_cast %arg7 : i32 to index
      %c0_24 = arith.constant 0 : index
      %c0_25 = arith.constant 0 : index
      %26 = vector.load %arg6[%c0_23, %25, %c0_24, %c0_25] : memref<2x8x8x256xf32, #tpu.memory_space<vmem>>, vector<1x1x8x256xf32>
      %27 = vector.shape_cast %26 : vector<1x1x8x256xf32> to vector<8x256xf32>
      %28 = vector.broadcast %19 : vector<1x256xf32> to vector<8x256xf32>
      %29 = arith.mulf %27, %28 : vector<8x256xf32>
      %30 = vector.broadcast %22 : vector<1x256xf32> to vector<8x256xf32>
      %31 = arith.addf %29, %30 : vector<8x256xf32>
      %c0_26 = arith.constant 0 : index
      %32 = arith.index_cast %arg7 : i32 to index
      %c0_27 = arith.constant 0 : index
      %c0_28 = arith.constant 0 : index
      %33 = vector.load %arg6[%c0_26, %32, %c0_27, %c0_28] : memref<2x8x8x256xf32, #tpu.memory_space<vmem>>, vector<1x1x8x256xf32>
      %34 = vector.shape_cast %33 : vector<1x1x8x256xf32> to vector<8x256xf32>
      %35 = vector.shape_cast %31 : vector<8x256xf32> to vector<1x1x8x256xf32>
      tpu.vector_store %arg6[%c0_26, %32, %c0_27, %c0_28], %35 {strides = array<i32>} : memref<2x8x8x256xf32, #tpu.memory_space<vmem>>, vector<1x1x8x256xf32>,
    }
    %c8_i32_18 = arith.constant 8 : i32
    %c0_i32_19 = arith.constant 0 : i32
    %c8_i32_20 = arith.constant 8 : i32
    %24 = arith.addi %c0_i32_19, %c8_i32_20 : i32
    %c1_i32_21 = arith.constant 1 : i32
    scf.for %arg7 = %c0_i32_19 to %24 step %c1_i32_21  : i32 {
      %c1 = arith.constant 1 : index
      %25 = arith.index_cast %arg7 : i32 to index
      %c0_23 = arith.constant 0 : index
      %c0_24 = arith.constant 0 : index
      %26 = vector.load %arg6[%c1, %25, %c0_23, %c0_24] : memref<2x8x8x256xf32, #tpu.memory_space<vmem>>, vector<1x1x8x256xf32>
      %27 = vector.shape_cast %26 : vector<1x1x8x256xf32> to vector<8x256xf32>
      %28 = vector.broadcast %19 : vector<1x256xf32> to vector<8x256xf32>
      %29 = arith.mulf %27, %28 : vector<8x256xf32>
      %30 = vector.broadcast %22 : vector<1x256xf32> to vector<8x256xf32>
      %31 = arith.addf %29, %30 : vector<8x256xf32>
      %c1_25 = arith.constant 1 : index
      %32 = arith.index_cast %arg7 : i32 to index
      %c0_26 = arith.constant 0 : index
      %c0_27 = arith.constant 0 : index
      %33 = vector.load %arg6[%c1_25, %32, %c0_26, %c0_27] : memref<2x8x8x256xf32, #tpu.memory_space<vmem>>, vector<1x1x8x256xf32>
      %34 = vector.shape_cast %33 : vector<1x1x8x256xf32> to vector<8x256xf32>
      %35 = vector.shape_cast %31 : vector<8x256xf32> to vector<1x1x8x256xf32>
      tpu.vector_store %arg6[%c1_25, %32, %c0_26, %c0_27], %35 {strides = array<i32>} : memref<2x8x8x256xf32, #tpu.memory_space<vmem>>, vector<1x1x8x256xf32>,
    }
    %c8_i32_22 = arith.constant 8 : i32
    return
  }
  func.func @transform_0(%arg0: i32) -> (i32, i32, i32, i32) {
    %c0_i32 = arith.constant 0 : i32
    %c0_i32_0 = arith.constant 0 : i32
    %c0_i32_1 = arith.constant 0 : i32
    %c0_i32_2 = arith.constant 0 : i32
    %c0_i32_3 = arith.constant 0 : i32
    return %c0_i32, %c0_i32_0, %c0_i32_1, %c0_i32_2 : i32, i32, i32, i32
  }
  func.func @transform_1(%arg0: i32) -> (i32, i32, i32, i32) {
    %c0_i32 = arith.constant 0 : i32
    %c0_i32_0 = arith.constant 0 : i32
    %c0_i32_1 = arith.constant 0 : i32
    %c0_i32_2 = arith.constant 0 : i32
    %c0_i32_3 = arith.constant 0 : i32
    return %c0_i32, %c0_i32_0, %c0_i32_1, %c0_i32_2 : i32, i32, i32, i32
  }
  func.func @transform_2(%arg0: i32) -> (i32, i32) {
    %c0_i32 = arith.constant 0 : i32
    %c0_i32_0 = arith.constant 0 : i32
    %c0_i32_1 = arith.constant 0 : i32
    return %c0_i32, %c0_i32_0 : i32, i32
  }
  func.func @transform_3(%arg0: i32) -> (i32, i32) {
    %c0_i32 = arith.constant 0 : i32
    %c0_i32_0 = arith.constant 0 : i32
    %c0_i32_1 = arith.constant 0 : i32
    return %c0_i32, %c0_i32_0 : i32, i32
  }
  func.func @transform_4(%arg0: i32) -> (i32, i32) {
    %c0_i32 = arith.constant 0 : i32
    %c0_i32_0 = arith.constant 0 : i32
    %c0_i32_1 = arith.constant 0 : i32
    return %c0_i32, %c0_i32_0 : i32, i32
  }
  func.func @transform_5(%arg0: i32) -> (i32, i32, i32, i32) {
    %c0_i32 = arith.constant 0 : i32
    %c0_i32_0 = arith.constant 0 : i32
    %c0_i32_1 = arith.constant 0 : i32
    %c0_i32_2 = arith.constant 0 : i32
    %c0_i32_3 = arith.constant 0 : i32
    return %c0_i32, %c0_i32_0, %c0_i32_1, %c0_i32_2 : i32, i32, i32, i32
  }
}

</mosaic_0001>

<llo_original>
// kernel: tpu_custom_call.1
$region0: #{tpu_custom_call.1}
  #allocation0 [shape = 'u32[]', space=smem, size = 0x4, offset = 0x4, fixed_abs, tag = 'smem constant byte address 0x4 - core index']
  #allocation1 [shape = 'u32[144,128]{1,0:T(1,128)}', space=vmem, size = 0x12000, scoped, tag = 'internal scratch']
  %s0 = inlined_call_operand.vmem [shape: f32[2,20,10,256], index: 0, kind: input, shape index: {}]
  %s1 = inlined_call_operand.vmem [shape: f32[2,20,10,256], index: 1, kind: input, shape index: {}]
  %s2 = inlined_call_operand.vmem [shape: f32[25,256], index: 2, kind: input, shape index: {}]
  %s3 = inlined_call_operand.vmem [shape: f32[1,256], index: 3, kind: input, shape index: {}]
  %s4 = inlined_call_operand.vmem [shape: f32[1,256], index: 4, kind: input, shape index: {}]
  %s5 = inlined_call_operand.hbm [shape: f32[2,8,8,256], index: 5, kind: output, shape index: {}]
  %s6 = sld [smem:[#allocation0]]
  $region58: #{tpu_custom_call.1} parent=0
    _
  %s8 = ssub.s32 1, %s6
  %s9 = scalar_select 0, %s8, %s6
  $region1: #{tpu_custom_call.1} parent=0
    #allocation2 [shape = 'u8[131072]{0}', space=vmem, size = 0x20000, scoped, tag = 'output window, operand 0, single buffered']
    #allocation3 [shape = 's32[1]{0}', space=sflag, size = 0x4, scoped, tag = 'scoped memory for tpu_custom_call.1']
    %10 = vsyncpa [#allocation3], 0
    // Predicated region
    $region2: #{tpu_custom_call.1} parent=1 // pred_check
      _
    $region3: #{tpu_custom_call.1} parent=1 // pred_check_branch
      %12 = sbr.rel (0) target = $region5
    $region4: #{tpu_custom_call.1} parent=1 // pred_region
      _
    $region5: #{tpu_custom_call.1} parent=1 // pred_fallthru
      _
    // Predicated region
    $region6: #{tpu_custom_call.1} parent=1 // pred_check
      _
    $region7: #{tpu_custom_call.1} parent=1 // pred_check_branch
      %14 = sbr.rel (0) target = $region9
    $region8: #{tpu_custom_call.1} parent=1 // pred_region
      _
    $region9: #{tpu_custom_call.1} parent=1 // pred_fallthru
      _
    // Predicated region
    $region10: #{tpu_custom_call.1} parent=1 // pred_check
      _
    $region11: #{tpu_custom_call.1} parent=1 // pred_check_branch
      %16 = sbr.rel (0) target = $region13
    $region12: #{tpu_custom_call.1} parent=1 // pred_region
      _
    $region13: #{tpu_custom_call.1} parent=1 // pred_fallthru
      _
    // Predicated region
    $region14: #{tpu_custom_call.1} parent=1 // pred_check
      _
    $region15: #{tpu_custom_call.1} parent=1 // pred_check_branch
      %18 = sbr.rel (0) target = $region17
    $region16: #{tpu_custom_call.1} parent=1 // pred_region
      _
    $region17: #{tpu_custom_call.1} parent=1 // pred_fallthru
      _
    // Predicated region
    $region18: #{tpu_custom_call.1} parent=1 // pred_check
      _
    $region19: #{tpu_custom_call.1} parent=1 // pred_check_branch
      %20 = sbr.rel (0) target = $region21
    $region20: #{tpu_custom_call.1} parent=1 // pred_region
      _
    $region21: #{tpu_custom_call.1} parent=1 // pred_fallthru
      _
    %v21 = vld [vmem:[%s2] sm:$0xff]
    %v22 = vld [vmem:[%s2 + $0x8] sm:$0xff]
    %v23 = vld [vmem:[%s2 + $0x10] sm:$0xff]
    %v24 = vld [vmem:[%s2 + $0x18] sm:$0xff]
    %v25 = vld [vmem:[%s2 + $0x20] sm:$0xff]
    %v26 = vld [vmem:[%s2 + $0x28] sm:$0xff]
    %v27 = vld [vmem:[%s2 + $0x30] sm:$0x1]
    %v28 = vld [vmem:[%s2 + $0x38] sm:$0x1]
    loop: start=0, step=1, limit=8
    $region22: #{tpu_custom_call.1} parent=1 // loop_pre_header
      _
    $region23: #{tpu_custom_call.1} parent=1 // loop_header
      %s30 = sphi 0, %s34
      %p31 = scmp.ge.s32.totalorder %s30, 8
      %v35 = vphi 0.0, %v677
      %v36 = vphi 0.0, %v678
      %v37 = vphi 0.0, %v693
      %v38 = vphi 0.0, %v694
    $region24: #{tpu_custom_call.1} parent=1 // loop_header_branch
      %33 = sbr.rel (%p31) target = $region28
    $region25: #{tpu_custom_call.1} parent=1 // loop_body
      %s39 = smul.u32 %s30, 2
      %s40 = smul.u32 %s39, 4
      %s41 = smul.addr %s40, 8
      %s42 = scalar_lea.vmem %s0, %s41
      %v43 = vld [vmem:[%s42] sm:$0xff]
      %v44 = vld [vmem:[%s42 + $0x8] sm:$0xff]
      %v45 = vlaneseq
      %v46 = vshrl.u32 %v45, 7
      %v47 = vsub.s32 0, %v46
      %v48 = vrot.slane %v21, %v47
      %v49 = vlaneseq
      %v50 = vshrl.u32 %v49, 7
      %v51 = vsub.s32 0, %v50
      %v52 = vrot.slane %v22, %v51
      %v53 = vmul.f32 %v43, %v48
      %v54 = vmul.f32 %v44, %v52
      %v55 = vadd.f32 %v53, 0.0
      %v56 = vadd.f32 %v54, 0.0
      %s57 = smul.addr %s40, 8
      %s58 = scalar_lea.vmem %s1, %s57
      %v59 = vld [vmem:[%s58] sm:$0xff]
      %v60 = vld [vmem:[%s58 + $0x8] sm:$0xff]
      %v61 = vlaneseq
      %v62 = vshrl.u32 %v61, 7
      %v63 = vsub.s32 1, %v62
      %v64 = vrot.slane %v21, %v63
      %v65 = vlaneseq
      %v66 = vshrl.u32 %v65, 7
      %v67 = vsub.s32 1, %v66
      %v68 = vrot.slane %v22, %v67
      %v69 = vmul.f32 %v59, %v64
      %v70 = vmul.f32 %v60, %v68
      %v71 = vadd.f32 %v55, %v69
      %v72 = vadd.f32 %v56, %v70
      %v73 = vld [vmem:[%s42] sm:$0xfe]
      %v74 = vld [vmem:[%s42 + $0x8] sm:$0xfe]
      %v75 = vld [vmem:[%s42 + $0x10] sm:$0x1]
      %v76 = vld [vmem:[%s42 + $0x18] sm:$0x1]
      %v77 = vlaneseq
      %v78 = vshrl.u32 %v77, 7
      %v79 = vsub.s32 2, %v78
      %v80 = vrot.slane %v21, %v79
      %v81 = vlaneseq
      %v82 = vshrl.u32 %v81, 7
      %v83 = vsub.s32 2, %v82
      %v84 = vrot.slane %v22, %v83
      %v85 = vmul.f32 %v73, %v80
      %v86 = vmul.f32 %v74, %v84
      %v87 = vmul.f32 %v75, %v80
      %v88 = vmul.f32 %v76, %v84
      %vm93 = vcmask 1046528
      %v94 = vrot.slane %v85, 1
      %v95 = vrot.slane %v87, 1
      %v96 = vsel %vm93, %v94, %v95
      %v97 = vrot.slane %v86, 1
      %v98 = vrot.slane %v88, 1
      %v99 = vsel %vm93, %v97, %v98
      %v102 = vadd.f32 %v71, %v96
      %v103 = vadd.f32 %v72, %v99
      %v104 = vld [vmem:[%s58] sm:$0xfe]
      %v105 = vld [vmem:[%s58 + $0x8] sm:$0xfe]
      %v106 = vld [vmem:[%s58 + $0x10] sm:$0x1]
      %v107 = vld [vmem:[%s58 + $0x18] sm:$0x1]
      %v108 = vlaneseq
      %v109 = vshrl.u32 %v108, 7
      %v110 = vsub.s32 3, %v109
      %v111 = vrot.slane %v21, %v110
      %v112 = vlaneseq
      %v113 = vshrl.u32 %v112, 7
      %v114 = vsub.s32 3, %v113
      %v115 = vrot.slane %v22, %v114
      %v116 = vmul.f32 %v104, %v111
      %v117 = vmul.f32 %v105, %v115
      %v118 = vmul.f32 %v106, %v111
      %v119 = vmul.f32 %v107, %v115
      %v124 = vrot.slane %v116, 1
      %v125 = vrot.slane %v118, 1
      %v126 = vsel %vm93, %v124, %v125
      %v127 = vrot.slane %v117, 1
      %v128 = vrot.slane %v119, 1
      %v129 = vsel %vm93, %v127, %v128
      %v132 = vadd.f32 %v102, %v126
      %v133 = vadd.f32 %v103, %v129
      %v134 = vld [vmem:[%s42] sm:$0xfc]
      %v135 = vld [vmem:[%s42 + $0x8] sm:$0xfc]
      %v136 = vld [vmem:[%s42 + $0x10] sm:$0x3]
      %v137 = vld [vmem:[%s42 + $0x18] sm:$0x3]
      %v138 = vlaneseq
      %v139 = vshrl.u32 %v138, 7
      %v140 = vsub.s32 4, %v139
      %v141 = vrot.slane %v21, %v140
      %v142 = vlaneseq
      %v143 = vshrl.u32 %v142, 7
      %v144 = vsub.s32 4, %v143
      %v145 = vrot.slane %v22, %v144
      %v146 = vmul.f32 %v134, %v141
      %v147 = vmul.f32 %v135, %v145
      %v148 = vmul.f32 %v136, %v141
      %v149 = vmul.f32 %v137, %v145
      %vm154 = vcmask 1045504
      %v155 = vrot.slane %v146, 2
      %v156 = vrot.slane %v148, 2
      %v157 = vsel %vm154, %v155, %v156
      %v158 = vrot.slane %v147, 2
      %v159 = vrot.slane %v149, 2
      %v160 = vsel %vm154, %v158, %v159
      %v163 = vadd.f32 %v132, %v157
      %v164 = vadd.f32 %v133, %v160
      %s165 = sadd.s32 %s39, 1
      %s166 = smul.u32 %s165, 4
      %s167 = smul.addr %s166, 8
      %s168 = scalar_lea.vmem %s0, %s167
      %v169 = vld [vmem:[%s168] sm:$0xff]
      %v170 = vld [vmem:[%s168 + $0x8] sm:$0xff]
      %v171 = vlaneseq
      %v172 = vshrl.u32 %v171, 7
      %v173 = vsub.s32 5, %v172
      %v174 = vrot.slane %v21, %v173
      %v175 = vlaneseq
      %v176 = vshrl.u32 %v175, 7
      %v177 = vsub.s32 5, %v176
      %v178 = vrot.slane %v22, %v177
      %v179 = vmul.f32 %v169, %v174
      %v180 = vmul.f32 %v170, %v178
      %v181 = vadd.f32 %v163, %v179
      %v182 = vadd.f32 %v164, %v180
      %s183 = smul.addr %s166, 8
      %s184 = scalar_lea.vmem %s1, %s183
      %v185 = vld [vmem:[%s184] sm:$0xff]
      %v186 = vld [vmem:[%s184 + $0x8] sm:$0xff]
      %v187 = vlaneseq
      %v188 = vshrl.u32 %v187, 7
      %v189 = vsub.s32 6, %v188
      %v190 = vrot.slane %v21, %v189
      %v191 = vlaneseq
      %v192 = vshrl.u32 %v191, 7
      %v193 = vsub.s32 6, %v192
      %v194 = vrot.slane %v22, %v193
      %v195 = vmul.f32 %v185, %v190
      %v196 = vmul.f32 %v186, %v194
      %v197 = vadd.f32 %v181, %v195
      %v198 = vadd.f32 %v182, %v196
      %v199 = vld [vmem:[%s168] sm:$0xfe]
      %v200 = vld [vmem:[%s168 + $0x8] sm:$0xfe]
      %v201 = vld [vmem:[%s168 + $0x10] sm:$0x1]
      %v202 = vld [vmem:[%s168 + $0x18] sm:$0x1]
      %v203 = vlaneseq
      %v204 = vshrl.u32 %v203, 7
      %v205 = vsub.s32 7, %v204
      %v206 = vrot.slane %v21, %v205
      %v207 = vlaneseq
      %v208 = vshrl.u32 %v207, 7
      %v209 = vsub.s32 7, %v208
      %v210 = vrot.slane %v22, %v209
      %v211 = vmul.f32 %v199, %v206
      %v212 = vmul.f32 %v200, %v210
      %v213 = vmul.f32 %v201, %v206
      %v214 = vmul.f32 %v202, %v210
      %v219 = vrot.slane %v211, 1
      %v220 = vrot.slane %v213, 1
      %v221 = vsel %vm93, %v219, %v220
      %v222 = vrot.slane %v212, 1
      %v223 = vrot.slane %v214, 1
      %v224 = vsel %vm93, %v222, %v223
      %v227 = vadd.f32 %v197, %v221
      %v228 = vadd.f32 %v198, %v224
      %v229 = vld [vmem:[%s184] sm:$0xfe]
      %v230 = vld [vmem:[%s184 + $0x8] sm:$0xfe]
      %v231 = vld [vmem:[%s184 + $0x10] sm:$0x1]
      %v232 = vld [vmem:[%s184 + $0x18] sm:$0x1]
      %v233 = vlaneseq
      %v234 = vshrl.u32 %v233, 7
      %v235 = vsub.s32 0, %v234
      %v236 = vrot.slane %v23, %v235
      %v237 = vlaneseq
      %v238 = vshrl.u32 %v237, 7
      %v239 = vsub.s32 0, %v238
      %v240 = vrot.slane %v24, %v239
      %v241 = vmul.f32 %v229, %v236
      %v242 = vmul.f32 %v230, %v240
      %v243 = vmul.f32 %v231, %v236
      %v244 = vmul.f32 %v232, %v240
      %v249 = vrot.slane %v241, 1
      %v250 = vrot.slane %v243, 1
      %v251 = vsel %vm93, %v249, %v250
      %v252 = vrot.slane %v242, 1
      %v253 = vrot.slane %v244, 1
      %v254 = vsel %vm93, %v252, %v253
      %v257 = vadd.f32 %v227, %v251
      %v258 = vadd.f32 %v228, %v254
      %v259 = vld [vmem:[%s168] sm:$0xfc]
      %v260 = vld [vmem:[%s168 + $0x8] sm:$0xfc]
      %v261 = vld [vmem:[%s168 + $0x10] sm:$0x3]
      %v262 = vld [vmem:[%s168 + $0x18] sm:$0x3]
      %v263 = vlaneseq
      %v264 = vshrl.u32 %v263, 7
      %v265 = vsub.s32 1, %v264
      %v266 = vrot.slane %v23, %v265
      %v267 = vlaneseq
      %v268 = vshrl.u32 %v267, 7
      %v269 = vsub.s32 1, %v268
      %v270 = vrot.slane %v24, %v269
      %v271 = vmul.f32 %v259, %v266
      %v272 = vmul.f32 %v260, %v270
      %v273 = vmul.f32 %v261, %v266
      %v274 = vmul.f32 %v262, %v270
      %v279 = vrot.slane %v271, 2
      %v280 = vrot.slane %v273, 2
      %v281 = vsel %vm154, %v279, %v280
      %v282 = vrot.slane %v272, 2
      %v283 = vrot.slane %v274, 2
      %v284 = vsel %vm154, %v282, %v283
      %v287 = vadd.f32 %v257, %v281
      %v288 = vadd.f32 %v258, %v284
      %s289 = sadd.s32 %s39, 2
      %s290 = smul.u32 %s289, 4
      %s291 = smul.addr %s290, 8
      %s292 = scalar_lea.vmem %s0, %s291
      %v293 = vld [vmem:[%s292] sm:$0xff]
      %v294 = vld [vmem:[%s292 + $0x8] sm:$0xff]
      %v295 = vlaneseq
      %v296 = vshrl.u32 %v295, 7
      %v297 = vsub.s32 2, %v296
      %v298 = vrot.slane %v23, %v297
      %v299 = vlaneseq
      %v300 = vshrl.u32 %v299, 7
      %v301 = vsub.s32 2, %v300
      %v302 = vrot.slane %v24, %v301
      %v303 = vmul.f32 %v293, %v298
      %v304 = vmul.f32 %v294, %v302
      %v305 = vadd.f32 %v287, %v303
      %v306 = vadd.f32 %v288, %v304
      %s307 = smul.addr %s290, 8
      %s308 = scalar_lea.vmem %s1, %s307
      %v309 = vld [vmem:[%s308] sm:$0xff]
      %v310 = vld [vmem:[%s308 + $0x8] sm:$0xff]
      %v311 = vlaneseq
      %v312 = vshrl.u32 %v311, 7
      %v313 = vsub.s32 3, %v312
      %v314 = vrot.slane %v23, %v313
      %v315 = vlaneseq
      %v316 = vshrl.u32 %v315, 7
      %v317 = vsub.s32 3, %v316
      %v318 = vrot.slane %v24, %v317
      %v319 = vmul.f32 %v309, %v314
      %v320 = vmul.f32 %v310, %v318
      %v321 = vadd.f32 %v305, %v319
      %v322 = vadd.f32 %v306, %v320
      %v323 = vld [vmem:[%s292] sm:$0xfe]
      %v324 = vld [vmem:[%s292 + $0x8] sm:$0xfe]
      %v325 = vld [vmem:[%s292 + $0x10] sm:$0x1]
      %v326 = vld [vmem:[%s292 + $0x18] sm:$0x1]
      %v327 = vlaneseq
      %v328 = vshrl.u32 %v327, 7
      %v329 = vsub.s32 4, %v328
      %v330 = vrot.slane %v23, %v329
      %v331 = vlaneseq
      %v332 = vshrl.u32 %v331, 7
      %v333 = vsub.s32 4, %v332
      %v334 = vrot.slane %v24, %v333
      %v335 = vmul.f32 %v323, %v330
      %v336 = vmul.f32 %v324, %v334
      %v337 = vmul.f32 %v325, %v330
      %v338 = vmul.f32 %v326, %v334
      %v343 = vrot.slane %v335, 1
      %v344 = vrot.slane %v337, 1
      %v345 = vsel %vm93, %v343, %v344
      %v346 = vrot.slane %v336, 1
      %v347 = vrot.slane %v338, 1
      %v348 = vsel %vm93, %v346, %v347
      %v351 = vadd.f32 %v321, %v345
      %v352 = vadd.f32 %v322, %v348
      %v353 = vld [vmem:[%s308] sm:$0xfe]
      %v354 = vld [vmem:[%s308 + $0x8] sm:$0xfe]
      %v355 = vld [vmem:[%s308 + $0x10] sm:$0x1]
      %v356 = vld [vmem:[%s308 + $0x18] sm:$0x1]
      %v357 = vlaneseq
      %v358 = vshrl.u32 %v357, 7
      %v359 = vsub.s32 5, %v358
      %v360 = vrot.slane %v23, %v359
      %v361 = vlaneseq
      %v362 = vshrl.u32 %v361, 7
      %v363 = vsub.s32 5, %v362
      %v364 = vrot.slane %v24, %v363
      %v365 = vmul.f32 %v353, %v360
      %v366 = vmul.f32 %v354, %v364
      %v367 = vmul.f32 %v355, %v360
      %v368 = vmul.f32 %v356, %v364
      %v373 = vrot.slane %v365, 1
      %v374 = vrot.slane %v367, 1
      %v375 = vsel %vm93, %v373, %v374
      %v376 = vrot.slane %v366, 1
      %v377 = vrot.slane %v368, 1
      %v378 = vsel %vm93, %v376, %v377
      %v381 = vadd.f32 %v351, %v375
      %v382 = vadd.f32 %v352, %v378
      %v383 = vld [vmem:[%s292] sm:$0xfc]
      %v384 = vld [vmem:[%s292 + $0x8] sm:$0xfc]
      %v385 = vld [vmem:[%s292 + $0x10] sm:$0x3]
      %v386 = vld [vmem:[%s292 + $0x18] sm:$0x3]
      %v387 = vlaneseq
      %v388 = vshrl.u32 %v387, 7
      %v389 = vsub.s32 6, %v388
      %v390 = vrot.slane %v23, %v389
      %v391 = vlaneseq
      %v392 = vshrl.u32 %v391, 7
      %v393 = vsub.s32 6, %v392
      %v394 = vrot.slane %v24, %v393
      %v395 = vmul.f32 %v383, %v390
      %v396 = vmul.f32 %v384, %v394
      %v397 = vmul.f32 %v385, %v390
      %v398 = vmul.f32 %v386, %v394
      %v403 = vrot.slane %v395, 2
      %v404 = vrot.slane %v397, 2
      %v405 = vsel %vm154, %v403, %v404
      %v406 = vrot.slane %v396, 2
      %v407 = vrot.slane %v398, 2
      %v408 = vsel %vm154, %v406, %v407
      %v411 = vadd.f32 %v381, %v405
      %v412 = vadd.f32 %v382, %v408
      %s413 = sadd.s32 %s39, 3
      %s414 = smul.u32 %s413, 4
      %s415 = smul.addr %s414, 8
      %s416 = scalar_lea.vmem %s0, %s415
      %v417 = vld [vmem:[%s416] sm:$0xff]
      %v418 = vld [vmem:[%s416 + $0x8] sm:$0xff]
      %v419 = vlaneseq
      %v420 = vshrl.u32 %v419, 7
      %v421 = vsub.s32 7, %v420
      %v422 = vrot.slane %v23, %v421
      %v423 = vlaneseq
      %v424 = vshrl.u32 %v423, 7
      %v425 = vsub.s32 7, %v424
      %v426 = vrot.slane %v24, %v425
      %v427 = vmul.f32 %v417, %v422
      %v428 = vmul.f32 %v418, %v426
      %v429 = vadd.f32 %v411, %v427
      %v430 = vadd.f32 %v412, %v428
      %s431 = smul.addr %s414, 8
      %s432 = scalar_lea.vmem %s1, %s431
      %v433 = vld [vmem:[%s432] sm:$0xff]
      %v434 = vld [vmem:[%s432 + $0x8] sm:$0xff]
      %v435 = vlaneseq
      %v436 = vshrl.u32 %v435, 7
      %v437 = vsub.s32 0, %v436
      %v438 = vrot.slane %v25, %v437
      %v439 = vlaneseq
      %v440 = vshrl.u32 %v439, 7
      %v441 = vsub.s32 0, %v440
      %v442 = vrot.slane %v26, %v441
      %v443 = vmul.f32 %v433, %v438
      %v444 = vmul.f32 %v434, %v442
      %v445 = vadd.f32 %v429, %v443
      %v446 = vadd.f32 %v430, %v444
      %v447 = vld [vmem:[%s416] sm:$0xfe]
      %v448 = vld [vmem:[%s416 + $0x8] sm:$0xfe]
      %v449 = vld [vmem:[%s416 + $0x10] sm:$0x1]
      %v450 = vld [vmem:[%s416 + $0x18] sm:$0x1]
      %v451 = vlaneseq
      %v452 = vshrl.u32 %v451, 7
      %v453 = vsub.s32 1, %v452
      %v454 = vrot.slane %v25, %v453
      %v455 = vlaneseq
      %v456 = vshrl.u32 %v455, 7
      %v457 = vsub.s32 1, %v456
      %v458 = vrot.slane %v26, %v457
      %v459 = vmul.f32 %v447, %v454
      %v460 = vmul.f32 %v448, %v458
      %v461 = vmul.f32 %v449, %v454
      %v462 = vmul.f32 %v450, %v458
      %v467 = vrot.slane %v459, 1
      %v468 = vrot.slane %v461, 1
      %v469 = vsel %vm93, %v467, %v468
      %v470 = vrot.slane %v460, 1
      %v471 = vrot.slane %v462, 1
      %v472 = vsel %vm93, %v470, %v471
      %v475 = vadd.f32 %v445, %v469
      %v476 = vadd.f32 %v446, %v472
      %v477 = vld [vmem:[%s432] sm:$0xfe]
      %v478 = vld [vmem:[%s432 + $0x8] sm:$0xfe]
      %v479 = vld [vmem:[%s432 + $0x10] sm:$0x1]
      %v480 = vld [vmem:[%s432 + $0x18] sm:$0x1]
      %v481 = vlaneseq
      %v482 = vshrl.u32 %v481, 7
      %v483 = vsub.s32 2, %v482
      %v484 = vrot.slane %v25, %v483
      %v485 = vlaneseq
      %v486 = vshrl.u32 %v485, 7
      %v487 = vsub.s32 2, %v486
      %v488 = vrot.slane %v26, %v487
      %v489 = vmul.f32 %v477, %v484
      %v490 = vmul.f32 %v478, %v488
      %v491 = vmul.f32 %v479, %v484
      %v492 = vmul.f32 %v480, %v488
      %v497 = vrot.slane %v489, 1
      %v498 = vrot.slane %v491, 1
      %v499 = vsel %vm93, %v497, %v498
      %v500 = vrot.slane %v490, 1
      %v501 = vrot.slane %v492, 1
      %v502 = vsel %vm93, %v500, %v501
      %v505 = vadd.f32 %v475, %v499
      %v506 = vadd.f32 %v476, %v502
      %v507 = vld [vmem:[%s416] sm:$0xfc]
      %v508 = vld [vmem:[%s416 + $0x8] sm:$0xfc]
      %v509 = vld [vmem:[%s416 + $0x10] sm:$0x3]
      %v510 = vld [vmem:[%s416 + $0x18] sm:$0x3]
      %v511 = vlaneseq
      %v512 = vshrl.u32 %v511, 7
      %v513 = vsub.s32 3, %v512
      %v514 = vrot.slane %v25, %v513
      %v515 = vlaneseq
      %v516 = vshrl.u32 %v515, 7
      %v517 = vsub.s32 3, %v516
      %v518 = vrot.slane %v26, %v517
      %v519 = vmul.f32 %v507, %v514
      %v520 = vmul.f32 %v508, %v518
      %v521 = vmul.f32 %v509, %v514
      %v522 = vmul.f32 %v510, %v518
      %v527 = vrot.slane %v519, 2
      %v528 = vrot.slane %v521, 2
      %v529 = vsel %vm154, %v527, %v528
      %v530 = vrot.slane %v520, 2
      %v531 = vrot.slane %v522, 2
      %v532 = vsel %vm154, %v530, %v531
      %v535 = vadd.f32 %v505, %v529
      %v536 = vadd.f32 %v506, %v532
      %s537 = sadd.s32 %s39, 4
      %s538 = smul.u32 %s537, 4
      %s539 = smul.addr %s538, 8
      %s540 = scalar_lea.vmem %s0, %s539
      %v541 = vld [vmem:[%s540] sm:$0xff]
      %v542 = vld [vmem:[%s540 + $0x8] sm:$0xff]
      %v543 = vlaneseq
      %v544 = vshrl.u32 %v543, 7
      %v545 = vsub.s32 4, %v544
      %v546 = vrot.slane %v25, %v545
      %v547 = vlaneseq
      %v548 = vshrl.u32 %v547, 7
      %v549 = vsub.s32 4, %v548
      %v550 = vrot.slane %v26, %v549
      %v551 = vmul.f32 %v541, %v546
      %v552 = vmul.f32 %v542, %v550
      %v553 = vadd.f32 %v535, %v551
      %v554 = vadd.f32 %v536, %v552
      %s555 = smul.addr %s538, 8
      %s556 = scalar_lea.vmem %s1, %s555
      %v557 = vld [vmem:[%s556] sm:$0xff]
      %v558 = vld [vmem:[%s556 + $0x8] sm:$0xff]
      %v559 = vlaneseq
      %v560 = vshrl.u32 %v559, 7
      %v561 = vsub.s32 5, %v560
      %v562 = vrot.slane %v25, %v561
      %v563 = vlaneseq
      %v564 = vshrl.u32 %v563, 7
      %v565 = vsub.s32 5, %v564
      %v566 = vrot.slane %v26, %v565
      %v567 = vmul.f32 %v557, %v562
      %v568 = vmul.f32 %v558, %v566
      %v569 = vadd.f32 %v553, %v567
      %v570 = vadd.f32 %v554, %v568
      %v571 = vld [vmem:[%s540] sm:$0xfe]
      %v572 = vld [vmem:[%s540 + $0x8] sm:$0xfe]
      %v573 = vld [vmem:[%s540 + $0x10] sm:$0x1]
      %v574 = vld [vmem:[%s540 + $0x18] sm:$0x1]
      %v575 = vlaneseq
      %v576 = vshrl.u32 %v575, 7
      %v577 = vsub.s32 6, %v576
      %v578 = vrot.slane %v25, %v577
      %v579 = vlaneseq
      %v580 = vshrl.u32 %v579, 7
      %v581 = vsub.s32 6, %v580
      %v582 = vrot.slane %v26, %v581
      %v583 = vmul.f32 %v571, %v578
      %v584 = vmul.f32 %v572, %v582
      %v585 = vmul.f32 %v573, %v578
      %v586 = vmul.f32 %v574, %v582
      %v591 = vrot.slane %v583, 1
      %v592 = vrot.slane %v585, 1
      %v593 = vsel %vm93, %v591, %v592
      %v594 = vrot.slane %v584, 1
      %v595 = vrot.slane %v586, 1
      %v596 = vsel %vm93, %v594, %v595
      %v599 = vadd.f32 %v569, %v593
      %v600 = vadd.f32 %v570, %v596
      %v601 = vld [vmem:[%s556] sm:$0xfe]
      %v602 = vld [vmem:[%s556 + $0x8] sm:$0xfe]
      %v603 = vld [vmem:[%s556 + $0x10] sm:$0x1]
      %v604 = vld [vmem:[%s556 + $0x18] sm:$0x1]
      %v605 = vlaneseq
      %v606 = vshrl.u32 %v605, 7
      %v607 = vsub.s32 7, %v606
      %v608 = vrot.slane %v25, %v607
      %v609 = vlaneseq
      %v610 = vshrl.u32 %v609, 7
      %v611 = vsub.s32 7, %v610
      %v612 = vrot.slane %v26, %v611
      %v613 = vmul.f32 %v601, %v608
      %v614 = vmul.f32 %v602, %v612
      %v615 = vmul.f32 %v603, %v608
      %v616 = vmul.f32 %v604, %v612
      %v621 = vrot.slane %v613, 1
      %v622 = vrot.slane %v615, 1
      %v623 = vsel %vm93, %v621, %v622
      %v624 = vrot.slane %v614, 1
      %v625 = vrot.slane %v616, 1
      %v626 = vsel %vm93, %v624, %v625
      %v629 = vadd.f32 %v599, %v623
      %v630 = vadd.f32 %v600, %v626
      %v631 = vld [vmem:[%s540] sm:$0xfc]
      %v632 = vld [vmem:[%s540 + $0x8] sm:$0xfc]
      %v633 = vld [vmem:[%s540 + $0x10] sm:$0x3]
      %v634 = vld [vmem:[%s540 + $0x18] sm:$0x3]
      %v635 = vlaneseq
      %v636 = vshrl.u32 %v635, 7
      %v637 = vsub.s32 0, %v636
      %v638 = vrot.slane %v27, %v637
      %v639 = vlaneseq
      %v640 = vshrl.u32 %v639, 7
      %v641 = vsub.s32 0, %v640
      %v642 = vrot.slane %v28, %v641
      %v643 = vmul.f32 %v631, %v638
      %v644 = vmul.f32 %v632, %v642
      %v645 = vmul.f32 %v633, %v638
      %v646 = vmul.f32 %v634, %v642
      %v651 = vrot.slane %v643, 2
      %v652 = vrot.slane %v645, 2
      %v653 = vsel %vm154, %v651, %v652
      %v654 = vrot.slane %v644, 2
      %v655 = vrot.slane %v646, 2
      %v656 = vsel %vm154, %v654, %v655
      %v659 = vadd.f32 %v629, %v653
      %v660 = vadd.f32 %v630, %v656
      %s661 = smul.addr %s39, 8
      %s662 = scalar_lea.vmem [#allocation2], %s661
      %663 = vst [vmem:[%s662] sm:$0xff] %v659
      %664 = vst [vmem:[%s662 + $0x8] sm:$0xff] %v660
      %v665 = vrot.slane %v659, 4
      %v666 = vadd.f32 %v659, %v665
      %v667 = vrot.slane %v666, 2
      %v668 = vadd.f32 %v666, %v667
      %v669 = vrot.slane %v668, 1
      %v670 = vadd.f32 %v668, %v669
      %v671 = vrot.slane %v660, 4
      %v672 = vadd.f32 %v660, %v671
      %v673 = vrot.slane %v672, 2
      %v674 = vadd.f32 %v672, %v673
      %v675 = vrot.slane %v674, 1
      %v676 = vadd.f32 %v674, %v675
      %v677 = vadd.f32 %v35, %v670
      %v678 = vadd.f32 %v36, %v676
      %v679 = vmul.f32 %v659, %v659
      %v680 = vmul.f32 %v660, %v660
      %v681 = vrot.slane %v679, 4
      %v682 = vadd.f32 %v679, %v681
      %v683 = vrot.slane %v682, 2
      %v684 = vadd.f32 %v682, %v683
      %v685 = vrot.slane %v684, 1
      %v686 = vadd.f32 %v684, %v685
      %v687 = vrot.slane %v680, 4
      %v688 = vadd.f32 %v680, %v687
      %v689 = vrot.slane %v688, 2
      %v690 = vadd.f32 %v688, %v689
      %v691 = vrot.slane %v690, 1
      %v692 = vadd.f32 %v690, %v691
      %v693 = vadd.f32 %v37, %v686
      %v694 = vadd.f32 %v38, %v692
    $region26: #{tpu_custom_call.1} parent=1 // loop_footer
      %s34 = sadd.s32 1, %s30
    $region27: #{tpu_custom_call.1} parent=1 // loop_footer_branch
      %29 = sbr.rel target = $region23
    $region28: #{tpu_custom_call.1} parent=1 // loop_exit
      _
    loop: start=0, step=1, limit=8
    $region29: #{tpu_custom_call.1} parent=1 // loop_pre_header
      _
    $region30: #{tpu_custom_call.1} parent=1 // loop_header
      %s696 = sphi 0, %s700
      %p697 = scmp.ge.s32.totalorder %s696, 8
      %v701 = vphi %v35, %v1349
      %v702 = vphi %v36, %v1350
      %v703 = vphi %v37, %v1365
      %v704 = vphi %v38, %v1366
    $region31: #{tpu_custom_call.1} parent=1 // loop_header_branch
      %699 = sbr.rel (%p697) target = $region35
    $region32: #{tpu_custom_call.1} parent=1 // loop_body
      %s705 = smul.u32 %s696, 2
      %s706 = smul.u32 %s705, 4
      %s707 = sadd.s32 %s706, 80
      %s708 = smul.addr %s707, 8
      %s709 = scalar_lea.vmem %s0, %s708
      %v710 = vld [vmem:[%s709] sm:$0xff]
      %v711 = vld [vmem:[%s709 + $0x8] sm:$0xff]
      %v712 = vlaneseq
      %v713 = vshrl.u32 %v712, 7
      %v714 = vsub.s32 0, %v713
      %v715 = vrot.slane %v21, %v714
      %v716 = vlaneseq
      %v717 = vshrl.u32 %v716, 7
      %v718 = vsub.s32 0, %v717
      %v719 = vrot.slane %v22, %v718
      %v720 = vmul.f32 %v710, %v715
      %v721 = vmul.f32 %v711, %v719
      %v722 = vadd.f32 %v720, 0.0
      %v723 = vadd.f32 %v721, 0.0
      %s724 = smul.addr %s707, 8
      %s725 = scalar_lea.vmem %s1, %s724
      %v726 = vld [vmem:[%s725] sm:$0xff]
      %v727 = vld [vmem:[%s725 + $0x8] sm:$0xff]
      %v728 = vlaneseq
      %v729 = vshrl.u32 %v728, 7
      %v730 = vsub.s32 1, %v729
      %v731 = vrot.slane %v21, %v730
      %v732 = vlaneseq
      %v733 = vshrl.u32 %v732, 7
      %v734 = vsub.s32 1, %v733
      %v735 = vrot.slane %v22, %v734
      %v736 = vmul.f32 %v726, %v731
      %v737 = vmul.f32 %v727, %v735
      %v738 = vadd.f32 %v722, %v736
      %v739 = vadd.f32 %v723, %v737
      %v740 = vld [vmem:[%s709] sm:$0xfe]
      %v741 = vld [vmem:[%s709 + $0x8] sm:$0xfe]
      %v742 = vld [vmem:[%s709 + $0x10] sm:$0x1]
      %v743 = vld [vmem:[%s709 + $0x18] sm:$0x1]
      %v744 = vlaneseq
      %v745 = vshrl.u32 %v744, 7
      %v746 = vsub.s32 2, %v745
      %v747 = vrot.slane %v21, %v746
      %v748 = vlaneseq
      %v749 = vshrl.u32 %v748, 7
      %v750 = vsub.s32 2, %v749
      %v751 = vrot.slane %v22, %v750
      %v752 = vmul.f32 %v740, %v747
      %v753 = vmul.f32 %v741, %v751
      %v754 = vmul.f32 %v742, %v747
      %v755 = vmul.f32 %v743, %v751
      %vm760 = vcmask 1046528
      %v761 = vrot.slane %v752, 1
      %v762 = vrot.slane %v754, 1
      %v763 = vsel %vm760, %v761, %v762
      %v764 = vrot.slane %v753, 1
      %v765 = vrot.slane %v755, 1
      %v766 = vsel %vm760, %v764, %v765
      %v769 = vadd.f32 %v738, %v763
      %v770 = vadd.f32 %v739, %v766
      %v771 = vld [vmem:[%s725] sm:$0xfe]
      %v772 = vld [vmem:[%s725 + $0x8] sm:$0xfe]
      %v773 = vld [vmem:[%s725 + $0x10] sm:$0x1]
      %v774 = vld [vmem:[%s725 + $0x18] sm:$0x1]
      %v775 = vlaneseq
      %v776 = vshrl.u32 %v775, 7
      %v777 = vsub.s32 3, %v776
      %v778 = vrot.slane %v21, %v777
      %v779 = vlaneseq
      %v780 = vshrl.u32 %v779, 7
      %v781 = vsub.s32 3, %v780
      %v782 = vrot.slane %v22, %v781
      %v783 = vmul.f32 %v771, %v778
      %v784 = vmul.f32 %v772, %v782
      %v785 = vmul.f32 %v773, %v778
      %v786 = vmul.f32 %v774, %v782
      %v791 = vrot.slane %v783, 1
      %v792 = vrot.slane %v785, 1
      %v793 = vsel %vm760, %v791, %v792
      %v794 = vrot.slane %v784, 1
      %v795 = vrot.slane %v786, 1
      %v796 = vsel %vm760, %v794, %v795
      %v799 = vadd.f32 %v769, %v793
      %v800 = vadd.f32 %v770, %v796
      %v801 = vld [vmem:[%s709] sm:$0xfc]
      %v802 = vld [vmem:[%s709 + $0x8] sm:$0xfc]
      %v803 = vld [vmem:[%s709 + $0x10] sm:$0x3]
      %v804 = vld [vmem:[%s709 + $0x18] sm:$0x3]
      %v805 = vlaneseq
      %v806 = vshrl.u32 %v805, 7
      %v807 = vsub.s32 4, %v806
      %v808 = vrot.slane %v21, %v807
      %v809 = vlaneseq
      %v810 = vshrl.u32 %v809, 7
      %v811 = vsub.s32 4, %v810
      %v812 = vrot.slane %v22, %v811
      %v813 = vmul.f32 %v801, %v808
      %v814 = vmul.f32 %v802, %v812
      %v815 = vmul.f32 %v803, %v808
      %v816 = vmul.f32 %v804, %v812
      %vm821 = vcmask 1045504
      %v822 = vrot.slane %v813, 2
      %v823 = vrot.slane %v815, 2
      %v824 = vsel %vm821, %v822, %v823
      %v825 = vrot.slane %v814, 2
      %v826 = vrot.slane %v816, 2
      %v827 = vsel %vm821, %v825, %v826
      %v830 = vadd.f32 %v799, %v824
      %v831 = vadd.f32 %v800, %v827
      %s832 = sadd.s32 %s705, 1
      %s833 = smul.u32 %s832, 4
      %s834 = sadd.s32 %s833, 80
      %s835 = smul.addr %s834, 8
      %s836 = scalar_lea.vmem %s0, %s835
      %v837 = vld [vmem:[%s836] sm:$0xff]
      %v838 = vld [vmem:[%s836 + $0x8] sm:$0xff]
      %v839 = vlaneseq
      %v840 = vshrl.u32 %v839, 7
      %v841 = vsub.s32 5, %v840
      %v842 = vrot.slane %v21, %v841
      %v843 = vlaneseq
      %v844 = vshrl.u32 %v843, 7
      %v845 = vsub.s32 5, %v844
      %v846 = vrot.slane %v22, %v845
      %v847 = vmul.f32 %v837, %v842
      %v848 = vmul.f32 %v838, %v846
      %v849 = vadd.f32 %v830, %v847
      %v850 = vadd.f32 %v831, %v848
      %s851 = smul.addr %s834, 8
      %s852 = scalar_lea.vmem %s1, %s851
      %v853 = vld [vmem:[%s852] sm:$0xff]
      %v854 = vld [vmem:[%s852 + $0x8] sm:$0xff]
      %v855 = vlaneseq
      %v856 = vshrl.u32 %v855, 7
      %v857 = vsub.s32 6, %v856
      %v858 = vrot.slane %v21, %v857
      %v859 = vlaneseq
      %v860 = vshrl.u32 %v859, 7
      %v861 = vsub.s32 6, %v860
      %v862 = vrot.slane %v22, %v861
      %v863 = vmul.f32 %v853, %v858
      %v864 = vmul.f32 %v854, %v862
      %v865 = vadd.f32 %v849, %v863
      %v866 = vadd.f32 %v850, %v864
      %v867 = vld [vmem:[%s836] sm:$0xfe]
      %v868 = vld [vmem:[%s836 + $0x8] sm:$0xfe]
      %v869 = vld [vmem:[%s836 + $0x10] sm:$0x1]
      %v870 = vld [vmem:[%s836 + $0x18] sm:$0x1]
      %v871 = vlaneseq
      %v872 = vshrl.u32 %v871, 7
      %v873 = vsub.s32 7, %v872
      %v874 = vrot.slane %v21, %v873
      %v875 = vlaneseq
      %v876 = vshrl.u32 %v875, 7
      %v877 = vsub.s32 7, %v876
      %v878 = vrot.slane %v22, %v877
      %v879 = vmul.f32 %v867, %v874
      %v880 = vmul.f32 %v868, %v878
      %v881 = vmul.f32 %v869, %v874
      %v882 = vmul.f32 %v870, %v878
      %v887 = vrot.slane %v879, 1
      %v888 = vrot.slane %v881, 1
      %v889 = vsel %vm760, %v887, %v888
      %v890 = vrot.slane %v880, 1
      %v891 = vrot.slane %v882, 1
      %v892 = vsel %vm760, %v890, %v891
      %v895 = vadd.f32 %v865, %v889
      %v896 = vadd.f32 %v866, %v892
      %v897 = vld [vmem:[%s852] sm:$0xfe]
      %v898 = vld [vmem:[%s852 + $0x8] sm:$0xfe]
      %v899 = vld [vmem:[%s852 + $0x10] sm:$0x1]
      %v900 = vld [vmem:[%s852 + $0x18] sm:$0x1]
      %v901 = vlaneseq
      %v902 = vshrl.u32 %v901, 7
      %v903 = vsub.s32 0, %v902
      %v904 = vrot.slane %v23, %v903
      %v905 = vlaneseq
      %v906 = vshrl.u32 %v905, 7
      %v907 = vsub.s32 0, %v906
      %v908 = vrot.slane %v24, %v907
      %v909 = vmul.f32 %v897, %v904
      %v910 = vmul.f32 %v898, %v908
      %v911 = vmul.f32 %v899, %v904
      %v912 = vmul.f32 %v900, %v908
      %v917 = vrot.slane %v909, 1
      %v918 = vrot.slane %v911, 1
      %v919 = vsel %vm760, %v917, %v918
      %v920 = vrot.slane %v910, 1
      %v921 = vrot.slane %v912, 1
      %v922 = vsel %vm760, %v920, %v921
      %v925 = vadd.f32 %v895, %v919
      %v926 = vadd.f32 %v896, %v922
      %v927 = vld [vmem:[%s836] sm:$0xfc]
      %v928 = vld [vmem:[%s836 + $0x8] sm:$0xfc]
      %v929 = vld [vmem:[%s836 + $0x10] sm:$0x3]
      %v930 = vld [vmem:[%s836 + $0x18] sm:$0x3]
      %v931 = vlaneseq
      %v932 = vshrl.u32 %v931, 7
      %v933 = vsub.s32 1, %v932
      %v934 = vrot.slane %v23, %v933
      %v935 = vlaneseq
      %v936 = vshrl.u32 %v935, 7
      %v937 = vsub.s32 1, %v936
      %v938 = vrot.slane %v24, %v937
      %v939 = vmul.f32 %v927, %v934
      %v940 = vmul.f32 %v928, %v938
      %v941 = vmul.f32 %v929, %v934
      %v942 = vmul.f32 %v930, %v938
      %v947 = vrot.slane %v939, 2
      %v948 = vrot.slane %v941, 2
      %v949 = vsel %vm821, %v947, %v948
      %v950 = vrot.slane %v940, 2
      %v951 = vrot.slane %v942, 2
      %v952 = vsel %vm821, %v950, %v951
      %v955 = vadd.f32 %v925, %v949
      %v956 = vadd.f32 %v926, %v952
      %s957 = sadd.s32 %s705, 2
      %s958 = smul.u32 %s957, 4
      %s959 = sadd.s32 %s958, 80
      %s960 = smul.addr %s959, 8
      %s961 = scalar_lea.vmem %s0, %s960
      %v962 = vld [vmem:[%s961] sm:$0xff]
      %v963 = vld [vmem:[%s961 + $0x8] sm:$0xff]
      %v964 = vlaneseq
      %v965 = vshrl.u32 %v964, 7
      %v966 = vsub.s32 2, %v965
      %v967 = vrot.slane %v23, %v966
      %v968 = vlaneseq
      %v969 = vshrl.u32 %v968, 7
      %v970 = vsub.s32 2, %v969
      %v971 = vrot.slane %v24, %v970
      %v972 = vmul.f32 %v962, %v967
      %v973 = vmul.f32 %v963, %v971
      %v974 = vadd.f32 %v955, %v972
      %v975 = vadd.f32 %v956, %v973
      %s976 = smul.addr %s959, 8
      %s977 = scalar_lea.vmem %s1, %s976
      %v978 = vld [vmem:[%s977] sm:$0xff]
      %v979 = vld [vmem:[%s977 + $0x8] sm:$0xff]
      %v980 = vlaneseq
      %v981 = vshrl.u32 %v980, 7
      %v982 = vsub.s32 3, %v981
      %v983 = vrot.slane %v23, %v982
      %v984 = vlaneseq
      %v985 = vshrl.u32 %v984, 7
      %v986 = vsub.s32 3, %v985
      %v987 = vrot.slane %v24, %v986
      %v988 = vmul.f32 %v978, %v983
      %v989 = vmul.f32 %v979, %v987
      %v990 = vadd.f32 %v974, %v988
      %v991 = vadd.f32 %v975, %v989
      %v992 = vld [vmem:[%s961] sm:$0xfe]
      %v993 = vld [vmem:[%s961 + $0x8] sm:$0xfe]
      %v994 = vld [vmem:[%s961 + $0x10] sm:$0x1]
      %v995 = vld [vmem:[%s961 + $0x18] sm:$0x1]
      %v996 = vlaneseq
      %v997 = vshrl.u32 %v996, 7
      %v998 = vsub.s32 4, %v997
      %v999 = vrot.slane %v23, %v998
      %v1000 = vlaneseq
      %v1001 = vshrl.u32 %v1000, 7
      %v1002 = vsub.s32 4, %v1001
      %v1003 = vrot.slane %v24, %v1002
      %v1004 = vmul.f32 %v992, %v999
      %v1005 = vmul.f32 %v993, %v1003
      %v1006 = vmul.f32 %v994, %v999
      %v1007 = vmul.f32 %v995, %v1003
      %v1012 = vrot.slane %v1004, 1
      %v1013 = vrot.slane %v1006, 1
      %v1014 = vsel %vm760, %v1012, %v1013
      %v1015 = vrot.slane %v1005, 1
      %v1016 = vrot.slane %v1007, 1
      %v1017 = vsel %vm760, %v1015, %v1016
      %v1020 = vadd.f32 %v990, %v1014
      %v1021 = vadd.f32 %v991, %v1017
      %v1022 = vld [vmem:[%s977] sm:$0xfe]
      %v1023 = vld [vmem:[%s977 + $0x8] sm:$0xfe]
      %v1024 = vld [vmem:[%s977 + $0x10] sm:$0x1]
      %v1025 = vld [vmem:[%s977 + $0x18] sm:$0x1]
      %v1026 = vlaneseq
      %v1027 = vshrl.u32 %v1026, 7
      %v1028 = vsub.s32 5, %v1027
      %v1029 = vrot.slane %v23, %v1028
      %v1030 = vlaneseq
      %v1031 = vshrl.u32 %v1030, 7
      %v1032 = vsub.s32 5, %v1031
      %v1033 = vrot.slane %v24, %v1032
      %v1034 = vmul.f32 %v1022, %v1029
      %v1035 = vmul.f32 %v1023, %v1033
      %v1036 = vmul.f32 %v1024, %v1029
      %v1037 = vmul.f32 %v1025, %v1033
      %v1042 = vrot.slane %v1034, 1
      %v1043 = vrot.slane %v1036, 1
      %v1044 = vsel %vm760, %v1042, %v1043
      %v1045 = vrot.slane %v1035, 1
      %v1046 = vrot.slane %v1037, 1
      %v1047 = vsel %vm760, %v1045, %v1046
      %v1050 = vadd.f32 %v1020, %v1044
      %v1051 = vadd.f32 %v1021, %v1047
      %v1052 = vld [vmem:[%s961] sm:$0xfc]
      %v1053 = vld [vmem:[%s961 + $0x8] sm:$0xfc]
      %v1054 = vld [vmem:[%s961 + $0x10] sm:$0x3]
      %v1055 = vld [vmem:[%s961 + $0x18] sm:$0x3]
      %v1056 = vlaneseq
      %v1057 = vshrl.u32 %v1056, 7
      %v1058 = vsub.s32 6, %v1057
      %v1059 = vrot.slane %v23, %v1058
      %v1060 = vlaneseq
      %v1061 = vshrl.u32 %v1060, 7
      %v1062 = vsub.s32 6, %v1061
      %v1063 = vrot.slane %v24, %v1062
      %v1064 = vmul.f32 %v1052, %v1059
      %v1065 = vmul.f32 %v1053, %v1063
      %v1066 = vmul.f32 %v1054, %v1059
      %v1067 = vmul.f32 %v1055, %v1063
      %v1072 = vrot.slane %v1064, 2
      %v1073 = vrot.slane %v1066, 2
      %v1074 = vsel %vm821, %v1072, %v1073
      %v1075 = vrot.slane %v1065, 2
      %v1076 = vrot.slane %v1067, 2
      %v1077 = vsel %vm821, %v1075, %v1076
      %v1080 = vadd.f32 %v1050, %v1074
      %v1081 = vadd.f32 %v1051, %v1077
      %s1082 = sadd.s32 %s705, 3
      %s1083 = smul.u32 %s1082, 4
      %s1084 = sadd.s32 %s1083, 80
      %s1085 = smul.addr %s1084, 8
      %s1086 = scalar_lea.vmem %s0, %s1085
      %v1087 = vld [vmem:[%s1086] sm:$0xff]
      %v1088 = vld [vmem:[%s1086 + $0x8] sm:$0xff]
      %v1089 = vlaneseq
      %v1090 = vshrl.u32 %v1089, 7
      %v1091 = vsub.s32 7, %v1090
      %v1092 = vrot.slane %v23, %v1091
      %v1093 = vlaneseq
      %v1094 = vshrl.u32 %v1093, 7
      %v1095 = vsub.s32 7, %v1094
      %v1096 = vrot.slane %v24, %v1095
      %v1097 = vmul.f32 %v1087, %v1092
      %v1098 = vmul.f32 %v1088, %v1096
      %v1099 = vadd.f32 %v1080, %v1097
      %v1100 = vadd.f32 %v1081, %v1098
      %s1101 = smul.addr %s1084, 8
      %s1102 = scalar_lea.vmem %s1, %s1101
      %v1103 = vld [vmem:[%s1102] sm:$0xff]
      %v1104 = vld [vmem:[%s1102 + $0x8] sm:$0xff]
      %v1105 = vlaneseq
      %v1106 = vshrl.u32 %v1105, 7
      %v1107 = vsub.s32 0, %v1106
      %v1108 = vrot.slane %v25, %v1107
      %v1109 = vlaneseq
      %v1110 = vshrl.u32 %v1109, 7
      %v1111 = vsub.s32 0, %v1110
      %v1112 = vrot.slane %v26, %v1111
      %v1113 = vmul.f32 %v1103, %v1108
      %v1114 = vmul.f32 %v1104, %v1112
      %v1115 = vadd.f32 %v1099, %v1113
      %v1116 = vadd.f32 %v1100, %v1114
      %v1117 = vld [vmem:[%s1086] sm:$0xfe]
      %v1118 = vld [vmem:[%s1086 + $0x8] sm:$0xfe]
      %v1119 = vld [vmem:[%s1086 + $0x10] sm:$0x1]
      %v1120 = vld [vmem:[%s1086 + $0x18] sm:$0x1]
      %v1121 = vlaneseq
      %v1122 = vshrl.u32 %v1121, 7
      %v1123 = vsub.s32 1, %v1122
      %v1124 = vrot.slane %v25, %v1123
      %v1125 = vlaneseq
      %v1126 = vshrl.u32 %v1125, 7
      %v1127 = vsub.s32 1, %v1126
      %v1128 = vrot.slane %v26, %v1127
      %v1129 = vmul.f32 %v1117, %v1124
      %v1130 = vmul.f32 %v1118, %v1128
      %v1131 = vmul.f32 %v1119, %v1124
      %v1132 = vmul.f32 %v1120, %v1128
      %v1137 = vrot.slane %v1129, 1
      %v1138 = vrot.slane %v1131, 1
      %v1139 = vsel %vm760, %v1137, %v1138
      %v1140 = vrot.slane %v1130, 1
      %v1141 = vrot.slane %v1132, 1
      %v1142 = vsel %vm760, %v1140, %v1141
      %v1145 = vadd.f32 %v1115, %v1139
      %v1146 = vadd.f32 %v1116, %v1142
      %v1147 = vld [vmem:[%s1102] sm:$0xfe]
      %v1148 = vld [vmem:[%s1102 + $0x8] sm:$0xfe]
      %v1149 = vld [vmem:[%s1102 + $0x10] sm:$0x1]
      %v1150 = vld [vmem:[%s1102 + $0x18] sm:$0x1]
      %v1151 = vlaneseq
      %v1152 = vshrl.u32 %v1151, 7
      %v1153 = vsub.s32 2, %v1152
      %v1154 = vrot.slane %v25, %v1153
      %v1155 = vlaneseq
      %v1156 = vshrl.u32 %v1155, 7
      %v1157 = vsub.s32 2, %v1156
      %v1158 = vrot.slane %v26, %v1157
      %v1159 = vmul.f32 %v1147, %v1154
      %v1160 = vmul.f32 %v1148, %v1158
      %v1161 = vmul.f32 %v1149, %v1154
      %v1162 = vmul.f32 %v1150, %v1158
      %v1167 = vrot.slane %v1159, 1
      %v1168 = vrot.slane %v1161, 1
      %v1169 = vsel %vm760, %v1167, %v1168
      %v1170 = vrot.slane %v1160, 1
      %v1171 = vrot.slane %v1162, 1
      %v1172 = vsel %vm760, %v1170, %v1171
      %v1175 = vadd.f32 %v1145, %v1169
      %v1176 = vadd.f32 %v1146, %v1172
      %v1177 = vld [vmem:[%s1086] sm:$0xfc]
      %v1178 = vld [vmem:[%s1086 + $0x8] sm:$0xfc]
      %v1179 = vld [vmem:[%s1086 + $0x10] sm:$0x3]
      %v1180 = vld [vmem:[%s1086 + $0x18] sm:$0x3]
      %v1181 = vlaneseq
      %v1182 = vshrl.u32 %v1181, 7
      %v1183 = vsub.s32 3, %v1182
      %v1184 = vrot.slane %v25, %v1183
      %v1185 = vlaneseq
      %v1186 = vshrl.u32 %v1185, 7
      %v1187 = vsub.s32 3, %v1186
      %v1188 = vrot.slane %v26, %v1187
      %v1189 = vmul.f32 %v1177, %v1184
      %v1190 = vmul.f32 %v1178, %v1188
      %v1191 = vmul.f32 %v1179, %v1184
      %v1192 = vmul.f32 %v1180, %v1188
      %v1197 = vrot.slane %v1189, 2
      %v1198 = vrot.slane %v1191, 2
      %v1199 = vsel %vm821, %v1197, %v1198
      %v1200 = vrot.slane %v1190, 2
      %v1201 = vrot.slane %v1192, 2
      %v1202 = vsel %vm821, %v1200, %v1201
      %v1205 = vadd.f32 %v1175, %v1199
      %v1206 = vadd.f32 %v1176, %v1202
      %s1207 = sadd.s32 %s705, 4
      %s1208 = smul.u32 %s1207, 4
      %s1209 = sadd.s32 %s1208, 80
      %s1210 = smul.addr %s1209, 8
      %s1211 = scalar_lea.vmem %s0, %s1210
      %v1212 = vld [vmem:[%s1211] sm:$0xff]
      %v1213 = vld [vmem:[%s1211 + $0x8] sm:$0xff]
      %v1214 = vlaneseq
      %v1215 = vshrl.u32 %v1214, 7
      %v1216 = vsub.s32 4, %v1215
      %v1217 = vrot.slane %v25, %v1216
      %v1218 = vlaneseq
      %v1219 = vshrl.u32 %v1218, 7
      %v1220 = vsub.s32 4, %v1219
      %v1221 = vrot.slane %v26, %v1220
      %v1222 = vmul.f32 %v1212, %v1217
      %v1223 = vmul.f32 %v1213, %v1221
      %v1224 = vadd.f32 %v1205, %v1222
      %v1225 = vadd.f32 %v1206, %v1223
      %s1226 = smul.addr %s1209, 8
      %s1227 = scalar_lea.vmem %s1, %s1226
      %v1228 = vld [vmem:[%s1227] sm:$0xff]
      %v1229 = vld [vmem:[%s1227 + $0x8] sm:$0xff]
      %v1230 = vlaneseq
      %v1231 = vshrl.u32 %v1230, 7
      %v1232 = vsub.s32 5, %v1231
      %v1233 = vrot.slane %v25, %v1232
      %v1234 = vlaneseq
      %v1235 = vshrl.u32 %v1234, 7
      %v1236 = vsub.s32 5, %v1235
      %v1237 = vrot.slane %v26, %v1236
      %v1238 = vmul.f32 %v1228, %v1233
      %v1239 = vmul.f32 %v1229, %v1237
      %v1240 = vadd.f32 %v1224, %v1238
      %v1241 = vadd.f32 %v1225, %v1239
      %v1242 = vld [vmem:[%s1211] sm:$0xfe]
      %v1243 = vld [vmem:[%s1211 + $0x8] sm:$0xfe]
      %v1244 = vld [vmem:[%s1211 + $0x10] sm:$0x1]
      %v1245 = vld [vmem:[%s1211 + $0x18] sm:$0x1]
      %v1246 = vlaneseq
      %v1247 = vshrl.u32 %v1246, 7
      %v1248 = vsub.s32 6, %v1247
      %v1249 = vrot.slane %v25, %v1248
      %v1250 = vlaneseq
      %v1251 = vshrl.u32 %v1250, 7
      %v1252 = vsub.s32 6, %v1251
      %v1253 = vrot.slane %v26, %v1252
      %v1254 = vmul.f32 %v1242, %v1249
      %v1255 = vmul.f32 %v1243, %v1253
      %v1256 = vmul.f32 %v1244, %v1249
      %v1257 = vmul.f32 %v1245, %v1253
      %v1262 = vrot.slane %v1254, 1
      %v1263 = vrot.slane %v1256, 1
      %v1264 = vsel %vm760, %v1262, %v1263
      %v1265 = vrot.slane %v1255, 1
      %v1266 = vrot.slane %v1257, 1
      %v1267 = vsel %vm760, %v1265, %v1266
      %v1270 = vadd.f32 %v1240, %v1264
      %v1271 = vadd.f32 %v1241, %v1267
      %v1272 = vld [vmem:[%s1227] sm:$0xfe]
      %v1273 = vld [vmem:[%s1227 + $0x8] sm:$0xfe]
      %v1274 = vld [vmem:[%s1227 + $0x10] sm:$0x1]
      %v1275 = vld [vmem:[%s1227 + $0x18] sm:$0x1]
      %v1276 = vlaneseq
      %v1277 = vshrl.u32 %v1276, 7
      %v1278 = vsub.s32 7, %v1277
      %v1279 = vrot.slane %v25, %v1278
      %v1280 = vlaneseq
      %v1281 = vshrl.u32 %v1280, 7
      %v1282 = vsub.s32 7, %v1281
      %v1283 = vrot.slane %v26, %v1282
      %v1284 = vmul.f32 %v1272, %v1279
      %v1285 = vmul.f32 %v1273, %v1283
      %v1286 = vmul.f32 %v1274, %v1279
      %v1287 = vmul.f32 %v1275, %v1283
      %v1292 = vrot.slane %v1284, 1
      %v1293 = vrot.slane %v1286, 1
      %v1294 = vsel %vm760, %v1292, %v1293
      %v1295 = vrot.slane %v1285, 1
      %v1296 = vrot.slane %v1287, 1
      %v1297 = vsel %vm760, %v1295, %v1296
      %v1300 = vadd.f32 %v1270, %v1294
      %v1301 = vadd.f32 %v1271, %v1297
      %v1302 = vld [vmem:[%s1211] sm:$0xfc]
      %v1303 = vld [vmem:[%s1211 + $0x8] sm:$0xfc]
      %v1304 = vld [vmem:[%s1211 + $0x10] sm:$0x3]
      %v1305 = vld [vmem:[%s1211 + $0x18] sm:$0x3]
      %v1306 = vlaneseq
      %v1307 = vshrl.u32 %v1306, 7
      %v1308 = vsub.s32 0, %v1307
      %v1309 = vrot.slane %v27, %v1308
      %v1310 = vlaneseq
      %v1311 = vshrl.u32 %v1310, 7
      %v1312 = vsub.s32 0, %v1311
      %v1313 = vrot.slane %v28, %v1312
      %v1314 = vmul.f32 %v1302, %v1309
      %v1315 = vmul.f32 %v1303, %v1313
      %v1316 = vmul.f32 %v1304, %v1309
      %v1317 = vmul.f32 %v1305, %v1313
      %v1322 = vrot.slane %v1314, 2
      %v1323 = vrot.slane %v1316, 2
      %v1324 = vsel %vm821, %v1322, %v1323
      %v1325 = vrot.slane %v1315, 2
      %v1326 = vrot.slane %v1317, 2
      %v1327 = vsel %vm821, %v1325, %v1326
      %v1330 = vadd.f32 %v1300, %v1324
      %v1331 = vadd.f32 %v1301, %v1327
      %s1332 = sadd.s32 %s705, 16
      %s1333 = smul.addr %s1332, 8
      %s1334 = scalar_lea.vmem [#allocation2], %s1333
      %1335 = vst [vmem:[%s1334] sm:$0xff] %v1330
      %1336 = vst [vmem:[%s1334 + $0x8] sm:$0xff] %v1331
      %v1337 = vrot.slane %v1330, 4
      %v1338 = vadd.f32 %v1330, %v1337
      %v1339 = vrot.slane %v1338, 2
      %v1340 = vadd.f32 %v1338, %v1339
      %v1341 = vrot.slane %v1340, 1
      %v1342 = vadd.f32 %v1340, %v1341
      %v1343 = vrot.slane %v1331, 4
      %v1344 = vadd.f32 %v1331, %v1343
      %v1345 = vrot.slane %v1344, 2
      %v1346 = vadd.f32 %v1344, %v1345
      %v1347 = vrot.slane %v1346, 1
      %v1348 = vadd.f32 %v1346, %v1347
      %v1349 = vadd.f32 %v701, %v1342
      %v1350 = vadd.f32 %v702, %v1348
      %v1351 = vmul.f32 %v1330, %v1330
      %v1352 = vmul.f32 %v1331, %v1331
      %v1353 = vrot.slane %v1351, 4
      %v1354 = vadd.f32 %v1351, %v1353
      %v1355 = vrot.slane %v1354, 2
      %v1356 = vadd.f32 %v1354, %v1355
      %v1357 = vrot.slane %v1356, 1
      %v1358 = vadd.f32 %v1356, %v1357
      %v1359 = vrot.slane %v1352, 4
      %v1360 = vadd.f32 %v1352, %v1359
      %v1361 = vrot.slane %v1360, 2
      %v1362 = vadd.f32 %v1360, %v1361
      %v1363 = vrot.slane %v1362, 1
      %v1364 = vadd.f32 %v1362, %v1363
      %v1365 = vadd.f32 %v703, %v1358
      %v1366 = vadd.f32 %v704, %v1364
    $region33: #{tpu_custom_call.1} parent=1 // loop_footer
      %s700 = sadd.s32 1, %s696
    $region34: #{tpu_custom_call.1} parent=1 // loop_footer_branch
      %695 = sbr.rel target = $region30
    $region35: #{tpu_custom_call.1} parent=1 // loop_exit
      _
    %v1367 = vmul.f32 %v701, 0.0078125
    %v1368 = vmul.f32 %v702, 0.0078125
    %v1369 = vmul.f32 %v703, 0.0078125
    %v1370 = vmul.f32 %v704, 0.0078125
    %v1371 = vmul.f32 %v1367, %v1367
    %v1372 = vmul.f32 %v1368, %v1368
    %v1373 = vsub.f32 %v1369, %v1371
    %v1374 = vsub.f32 %v1370, %v1372
    %v1375 = vmax.f32 %v1373, 0.0
    %v1376 = vmax.f32 %v1374, 0.0
    %v1377 = vld [vmem:[%s3] sm:$0x3]
    %v1378 = vadd.f32 %v1375, 0.001
    %v1379 = vadd.f32 %v1376, 0.001
    %v1380 = vrsqrt.pop %v1378
    %v1381 = vrsqrt.pop %v1379
    %v1384 = vcombine.low %v1380, %v1381
    %v1386 = vunpack.c.l.s4 1966171168
    %v1387 = vunpack.c.0.s8 %v1386
    %v1388 = vlaneseq
    %v1389 = vshrl.u32 %v1388, 7
    %v1390 = vsub.s32 %v1387, %v1389
    %v1391 = vrot.slane %v1384, %v1390
    %v1393 = vunpack.c.l.s4 1966171168
    %v1394 = vunpack.c.0.s8 %v1393
    %v1395 = vlaneseq
    %v1396 = vshrl.u32 %v1395, 7
    %v1397 = vsub.s32 %v1394, %v1396
    %v1398 = vrot.slane %v1391, %v1397
    %v1400 = vmul.f32 %v1377, %v1398
    %v1401 = vld [vmem:[%s4] sm:$0x3]
    %v1403 = vlaneseq
    %v1404 = vshrl.u32 %v1403, 7
    %v1405 = vsub.s32 0, %v1404
    %v1406 = vrot.slane %v1400, %v1405
    %v1407 = vlaneseq
    %v1408 = vshrl.u32 %v1407, 7
    %v1409 = vsub.s32 1, %v1408
    %v1410 = vrot.slane %v1400, %v1409
    %v1413 = vmul.f32 %v1367, %v1406
    %v1414 = vmul.f32 %v1368, %v1410
    %v1417 = vcombine.low %v1413, %v1414
    %v1419 = vunpack.c.l.s4 1966171168
    %v1420 = vunpack.c.0.s8 %v1419
    %v1421 = vlaneseq
    %v1422 = vshrl.u32 %v1421, 7
    %v1423 = vsub.s32 %v1420, %v1422
    %v1424 = vrot.slane %v1417, %v1423
    %v1426 = vunpack.c.l.s4 1966171168
    %v1427 = vunpack.c.0.s8 %v1426
    %v1428 = vlaneseq
    %v1429 = vshrl.u32 %v1428, 7
    %v1430 = vsub.s32 %v1427, %v1429
    %v1431 = vrot.slane %v1424, %v1430
    %v1433 = vsub.f32 %v1401, %v1431
    loop: start=0, step=1, limit=8
    $region36: #{tpu_custom_call.1} parent=1 // loop_pre_header
      _
    $region37: #{tpu_custom_call.1} parent=1 // loop_header
      %s1435 = sphi 0, %s1439
      %p1436 = scmp.ge.s32.totalorder %s1435, 8
    $region38: #{tpu_custom_call.1} parent=1 // loop_header_branch
      %1438 = sbr.rel (%p1436) target = $region42
    $region39: #{tpu_custom_call.1} parent=1 // loop_body
      %s1440 = smul.u32 %s1435, 2
      %s1441 = smul.addr %s1440, 8
      %s1442 = scalar_lea.vmem [#allocation2], %s1441
      %v1443 = vld [vmem:[%s1442] sm:$0xff]
      %v1444 = vld [vmem:[%s1442 + $0x8] sm:$0xff]
      %v1445 = vmul.f32 %v1443, %v1406
      %v1446 = vmul.f32 %v1444, %v1410
      %v1448 = vlaneseq
      %v1449 = vshrl.u32 %v1448, 7
      %v1450 = vsub.s32 0, %v1449
      %v1451 = vrot.slane %v1433, %v1450
      %v1452 = vlaneseq
      %v1453 = vshrl.u32 %v1452, 7
      %v1454 = vsub.s32 1, %v1453
      %v1455 = vrot.slane %v1433, %v1454
      %v1458 = vadd.f32 %v1445, %v1451
      %v1459 = vadd.f32 %v1446, %v1455
      %1460 = vst [vmem:[%s1442] sm:$0xff] %v1458
      %1461 = vst [vmem:[%s1442 + $0x8] sm:$0xff] %v1459
    $region40: #{tpu_custom_call.1} parent=1 // loop_footer
      %s1439 = sadd.s32 1, %s1435
    $region41: #{tpu_custom_call.1} parent=1 // loop_footer_branch
      %1434 = sbr.rel target = $region37
    $region42: #{tpu_custom_call.1} parent=1 // loop_exit
      _
    loop: start=0, step=1, limit=8
    $region43: #{tpu_custom_call.1} parent=1 // loop_pre_header
      _
    $region44: #{tpu_custom_call.1} parent=1 // loop_header
      %s1463 = sphi 0, %s1467
      %p1464 = scmp.ge.s32.totalorder %s1463, 8
    $region45: #{tpu_custom_call.1} parent=1 // loop_header_branch
      %1466 = sbr.rel (%p1464) target = $region49
    $region46: #{tpu_custom_call.1} parent=1 // loop_body
      %s1468 = smul.u32 %s1463, 2
      %s1469 = sadd.s32 %s1468, 16
      %s1470 = smul.addr %s1469, 8
      %s1471 = scalar_lea.vmem [#allocation2], %s1470
      %v1472 = vld [vmem:[%s1471] sm:$0xff]
      %v1473 = vld [vmem:[%s1471 + $0x8] sm:$0xff]
      %v1474 = vmul.f32 %v1472, %v1406
      %v1475 = vmul.f32 %v1473, %v1410
      %v1477 = vlaneseq
      %v1478 = vshrl.u32 %v1477, 7
      %v1479 = vsub.s32 0, %v1478
      %v1480 = vrot.slane %v1433, %v1479
      %v1481 = vlaneseq
      %v1482 = vshrl.u32 %v1481, 7
      %v1483 = vsub.s32 1, %v1482
      %v1484 = vrot.slane %v1433, %v1483
      %v1487 = vadd.f32 %v1474, %v1480
      %v1488 = vadd.f32 %v1475, %v1484
      %1489 = vst [vmem:[%s1471] sm:$0xff] %v1487
      %1490 = vst [vmem:[%s1471 + $0x8] sm:$0xff] %v1488
    $region47: #{tpu_custom_call.1} parent=1 // loop_footer
      %s1467 = sadd.s32 1, %s1463
    $region48: #{tpu_custom_call.1} parent=1 // loop_footer_branch
      %1462 = sbr.rel target = $region44
    $region49: #{tpu_custom_call.1} parent=1 // loop_exit
      _
    // Predicated region
    $region50: #{tpu_custom_call.1} parent=1 // pred_check
      _
    $region51: #{tpu_custom_call.1} parent=1 // pred_check_branch
      %1492 = sbr.rel (0) target = $region53
    $region52: #{tpu_custom_call.1} parent=1 // pred_region
      %s1494 = ssub.s32 4096, 4096
      %1495 = vsyncadd [#allocation3], %s1494
      %s1496 = sshll.u32 [#allocation2], 4
      %s1497 = int_to_ptr.vmem [resolvable:$true] %s1496
      %1502 = dma.vmem_to_hbm [thread:$0]  %s1497, 4096, %s5, [#allocation3], 256, 256, 16
    $region53: #{tpu_custom_call.1} parent=1 // pred_fallthru
      _
    // Predicated region
    $region54: #{tpu_custom_call.1} parent=1 // pred_check
      _
    $region55: #{tpu_custom_call.1} parent=1 // pred_check_branch
      %1504 = sbr.rel (0) target = $region57
    $region56: #{tpu_custom_call.1} parent=1 // pred_region
      %1505 = dma.done [#allocation3], 4096
    $region57: #{tpu_custom_call.1} parent=1 // pred_fallthru
      _
    %1506 = vsyncpa [#allocation3], 1

</llo_original>
